<compile_context>
chip_gen: v5e
topology: v5e:2x2
jax: 0.10.0
libtpu: 0.0.40
codegen_flags: <defaults>
</compile_context>

<pallas_src>
import functools

import jax
import jax.numpy as jnp
from jax.experimental import pallas as pl
from jax.experimental.pallas import tpu as pltpu


def _round_up(x, m):
    return ((x + m - 1) // m) * m


# ---------------------------------------------------------------------------
# Kernel 1: up_mlp  (Conv1d k=1 no-bias, BN scale pre-folded into W) + ReLU
# ---------------------------------------------------------------------------
def _up_mlp_kernel(x_ref, w_ref, b_ref, y_ref):
    acc = jnp.dot(x_ref[...], w_ref[...], preferred_element_type=jnp.float32)
    y_ref[...] = jnp.maximum(acc + b_ref[...], 0.0).astype(y_ref.dtype)


# ---------------------------------------------------------------------------
# Kernel 2: knn_interpolate(k=3) + lateral_mlp + add, per (batch, M-tile)
# ---------------------------------------------------------------------------
def _interp_lateral_kernel(xu_ref, pt_ref, xold_ref, pold_ref,
                           wlat_ref, blat_ref, y_ref,
                           *, n_real, tile_n, num_n, den_col, use_den_col,
                           unroll):
    po = pold_ref[...]                       # (TILE_M, 3) f32 target coords
    tile_m = po.shape[0]
    cp = y_ref.shape[-1]
    BIG = jnp.float32(1e30)

    def dist_block(nc):
        # Squared distances target-tile x source-chunk, built on the VPU
        # (K=3 on the MXU would waste the systolic array; |a|^2+|b|^2-2ab
        # suffers cancellation).  p is pre-transposed to (3, N) outside.
        n0 = pl.multiple_of(nc * tile_n, tile_n)
        pt = pt_ref[:, pl.ds(n0, tile_n)]                    # (3, TILE_N)
        d = (po[:, 0:1] - pt[0:1, :]) ** 2
        for c in (1, 2):
            diff = po[:, c:c + 1] - pt[c:c + 1, :]
            d = d + diff * diff
        col = n0 + jax.lax.broadcasted_iota(jnp.int32, (tile_m, tile_n), 1)
        return jnp.where(col < n_real, d, BIG)               # mask padded sources

    # ---- pass 1: online running top-3 smallest distances per target row ----
    # TODO(synk): torch_geometric.knn breaks exact-distance ties by index; the
    # masked-min chain here can skip ranks / select >3 neighbors on exact ties.
    def pass1(nc, carry):
        t1, t2, t3 = carry
        d = dist_block(nc)
        c1 = jnp.min(d, axis=-1, keepdims=True)
        d2 = jnp.where(d <= c1, BIG, d)
        c2 = jnp.min(d2, axis=-1, keepdims=True)
        d3 = jnp.where(d2 <= c2, BIG, d2)
        c3 = jnp.min(d3, axis=-1, keepdims=True)
        # merge two sorted triples -> 3 smallest of the union (order statistics)
        m1 = jnp.minimum(t1, c1)
        m2 = jnp.minimum(jnp.minimum(t2, c2), jnp.maximum(t1, c1))
        m3 = jnp.minimum(jnp.minimum(t3, c3),
                         jnp.minimum(jnp.maximum(t1, c2), jnp.maximum(t2, c1)))
        return m1, m2, m3

    big_col = jnp.full((tile_m, 1), BIG, jnp.float32)
    _, _, t3 = jax.lax.fori_loop(0, num_n, pass1, (big_col, big_col, big_col),
                                 unroll=unroll)

    # ---- pass 2: inverse-square-distance weighted accumulation -------------
    def pass2(nc, carry):
        d = dist_block(nc)
        inv = pl.reciprocal(jnp.maximum(d, 1e-16), approx=True)   # EUP, not VALU
        w = jnp.where(d <= t3, inv, 0.0).astype(jnp.bfloat16)
        n0 = pl.multiple_of(nc * tile_n, tile_n)
        xu_c = xu_ref[pl.ds(n0, tile_n), :]                       # (TILE_N, Cp) bf16
        if use_den_col:
            # xu carries a constant-one channel, so numerator and denominator
            # come out of the same MXU matmul.
            return carry + jnp.dot(w, xu_c, preferred_element_type=jnp.float32)
        acc, den = carry
        acc = acc + jnp.dot(w, xu_c, preferred_element_type=jnp.float32)
        den = den + jnp.sum(w.astype(jnp.float32), axis=-1, keepdims=True)
        return acc, den

    acc0 = jnp.zeros((tile_m, cp), jnp.float32)
    if use_den_col:
        num = jax.lax.fori_loop(0, num_n, pass2, acc0, unroll=unroll)
        den = num[:, den_col:den_col + 1]
    else:
        num, den = jax.lax.fori_loop(
            0, num_n, pass2, (acc0, jnp.zeros((tile_m, 1), jnp.float32)),
            unroll=unroll)
    interp = num * pl.reciprocal(jnp.maximum(den, 1e-30), approx=True)

    # ---- lateral_mlp on x_old (BN scale pre-folded into w_lat), then add ---
    xl = jnp.dot(xold_ref[...], wlat_ref[...], preferred_element_type=jnp.float32)
    xl = jnp.maximum(xl + blat_ref[...], 0.0)

    y_ref[...] = (interp + xl).astype(y_ref.dtype)


# ---------------------------------------------------------------------------
# Wrapper
# ---------------------------------------------------------------------------
def transition_up(x, p, x_old, p_old, params, *, tile_m=256, tile_n=512,
                  tile_n_up=1024):
    """x:(B,N,Cin), p:(B,N,3), x_old:(B,M,Cout), p_old:(B,M,3) -> (y:(B,M,Cout), p_old).

    tile_m / tile_n: kernel-2 target tile and source chunk (sweep per
    generation; tile_m=128 is a better default on v5e's 128-wide MXU).
    tile_n_up: kernel-1 row tile (up_mlp is memory bound; bigger is better).
    """
    B, N, Cin = x.shape
    _, M, Cout = x_old.shape
    assert N >= 3, "knn_interpolate(k=3) needs at least 3 source points"

    f32, bf16 = jnp.float32, jnp.bfloat16

    # ---- padded sizes (lane-dense output, MXU-aligned channels) ------------
    cin_p = _round_up(Cin, 128)
    use_den_col = (Cout % 128) != 0
    if use_den_col:
        cp = _round_up(Cout + 1, 128)    # spare channel carries the fused denominator
        den_col = Cout
    else:
        cp = Cout                        # already lane-aligned: no dead MXU columns
        den_col = -1

    tile_n = min(tile_n, _round_up(N, 128))
    tile_n_up = max(tile_n, min(tile_n_up, _round_up(N, 128)))
    tile_n_up = (tile_n_up // tile_n) * tile_n   # keep n_pad divisible by both tiles
    tile_m = min(tile_m, _round_up(M, 8))
    n_pad = _round_up(N, tile_n_up)
    m_pad = _round_up(M, tile_m)
    num_n = n_pad // tile_n
    unroll = num_n if num_n <= 8 else 2          # keep chunk overlap visible to LLO

    # ---- fold BN scale into conv weights, pad parameters --------------------
    w_up_eff = params["w_up"] * params["s_up"]       # (Cin, Cout) * (1, Cout)
    w_lat_eff = params["w_lat"] * params["s_lat"]

    w_up = jnp.zeros((cin_p, cp), bf16).at[:Cin, :Cout].set(w_up_eff.astype(bf16))
    b_up = jnp.zeros((1, cp), f32).at[:, :Cout].set(params["b_up"])
    if use_den_col:
        b_up = b_up.at[0, den_col].set(1.0)          # ReLU(0 + 1) == 1 -> ones column

    w_lat = jnp.zeros((cp, cp), bf16).at[:Cout, :Cout].set(w_lat_eff.astype(bf16))
    b_lat = jnp.zeros((1, cp), f32).at[:, :Cout].set(params["b_lat"])

    # ---- pad inputs (padded rows/cols are masked out of the interpolation) -
    x_p = jnp.zeros((B, n_pad, cin_p), bf16).at[:, :N, :Cin].set(x.astype(bf16))
    p_t = jnp.zeros((B, 3, n_pad), f32).at[:, :, :N].set(jnp.swapaxes(p, 1, 2))
    xo_p = jnp.zeros((B, m_pad, cp), bf16).at[:, :M, :Cout].set(x_old.astype(bf16))
    po_p = jnp.zeros((B, m_pad, 3), f32).at[:, :M, :].set(p_old)

    # ---- VMEM budget from actual resident block sizes + physical capacity --
    xu_resident = 2 * n_pad * cp * 2                        # double-buffered bf16 xu
    k2_resident = (xu_resident
                   + 2 * 8 * n_pad * 4                      # p^T (sublane padded)
                   + 2 * tile_m * cp * 2                    # x_old tile
                   + 2 * tile_m * 128 * 4                   # p_old tile (lane padded)
                   + 2 * cp * cp * 2                        # w_lat
                   + 2 * 8 * cp * 4                         # b_lat
                   + 2 * tile_m * cp * 2)                   # output tile
    k2_temps = 8 * tile_m * tile_n * 4 + 3 * tile_m * cp * 4
    k1_resident = (2 * tile_n_up * cin_p * 2 + 2 * tile_n_up * cp * 2
                   + 2 * cin_p * cp * 2 + 2 * 8 * cp * 4)
    needed = max(k1_resident + tile_n_up * cp * 4, k2_resident + k2_temps)

    try:
        phys_vmem = pltpu.get_tpu_info().vmem_capacity_bytes
    except Exception:  # pragma: no cover - conservative fallback
        phys_vmem = 128 * 2 ** 20
    usable = max(32 * 2 ** 20, phys_vmem - 20 * 2 ** 20)    # leave compiler headroom
    vmem_limit = int(min(usable, max(32 * 2 ** 20, int(needed * 1.25))))
    # TODO(synk): when k2_resident exceeds `usable` (very large N, notably v7x's
    # 64 MiB VMEM), switch xu to memory_space=pl.ANY and stream (tile_n, cp)
    # chunks with manually double-buffered make_async_copy inside pass2.

    # On v7x megacore, avoid duplicating a large resident xu across both cores:
    # shard the grid over batch only when xu is big.
    mi_sem = "arbitrary" if xu_resident > 8 * 2 ** 20 else "parallel"

    # ---- kernel 1: up_mlp over the coarse points ----------------------------
    xu = pl.pallas_call(
        _up_mlp_kernel,
        out_shape=jax.ShapeDtypeStruct((B, n_pad, cp), bf16),
        grid_spec=pltpu.PrefetchScalarGridSpec(
            num_scalar_prefetch=0,
            grid=(B, n_pad // tile_n_up),
            in_specs=[
                pl.BlockSpec((None, tile_n_up, cin_p), lambda b, ni: (b, ni, 0)),
                pl.BlockSpec((cin_p, cp), lambda b, ni: (0, 0)),
                pl.BlockSpec((1, cp), lambda b, ni: (0, 0)),
            ],
            out_specs=pl.BlockSpec((None, tile_n_up, cp), lambda b, ni: (b, ni, 0)),
        ),
        compiler_params=pltpu.CompilerParams(
            dimension_semantics=("parallel", "parallel"),
            vmem_limit_bytes=vmem_limit),
    )(x_p, w_up, b_up)

    # ---- kernel 2: knn-interpolate + lateral_mlp + add ----------------------
    kernel = functools.partial(
        _interp_lateral_kernel, n_real=N, tile_n=tile_n, num_n=num_n,
        den_col=den_col, use_den_col=use_den_col, unroll=unroll)
    y_p = pl.pallas_call(
        kernel,
        out_shape=jax.ShapeDtypeStruct((B, m_pad, cp), bf16),
        grid_spec=pltpu.PrefetchScalarGridSpec(
            num_scalar_prefetch=0,
            grid=(B, m_pad // tile_m),
            in_specs=[
                pl.BlockSpec((None, n_pad, cp), lambda b, mi: (b, 0, 0)),    # xu (bf16)
                pl.BlockSpec((None, 3, n_pad), lambda b, mi: (b, 0, 0)),     # p^T (f32)
                pl.BlockSpec((None, tile_m, cp), lambda b, mi: (b, mi, 0)),  # x_old tile
                pl.BlockSpec((None, tile_m, 3), lambda b, mi: (b, mi, 0)),   # p_old tile
                pl.BlockSpec((cp, cp), lambda b, mi: (0, 0)),                # w_lat
                pl.BlockSpec((1, cp), lambda b, mi: (0, 0)),                 # b_lat
            ],
            out_specs=pl.BlockSpec((None, tile_m, cp), lambda b, mi: (b, mi, 0)),
        ),
        compiler_params=pltpu.CompilerParams(
            dimension_semantics=("parallel", mi_sem),
            vmem_limit_bytes=vmem_limit),
    )(xu, p_t, xo_p, po_p, w_lat, b_lat)

    y = y_p[:, :M, :Cout].astype(x_old.dtype)
    return y, p_old


# ---------------------------------------------------------------------------
# Synthetic parameters (Conv1d weights + folded eval-mode BatchNorm stats)
# ---------------------------------------------------------------------------
def make_params(key, in_channels, out_channels, eps=1e-5):
    k1, k2 = jax.random.split(key)
    # Conv1d weight is (Cout, Cin, 1) in torch; store its transpose (Cin, Cout).
    w_up = jax.random.normal(k1, (in_channels, out_channels), jnp.float32) * 0.1
    w_lat = jax.random.normal(k2, (out_channels, out_channels), jnp.float32) * 0.1

    def bn_fold(c, salt):
        i = jnp.arange(c, dtype=jnp.float32)
        gamma = 1.0 + 0.01 * i
        beta = 0.02 * (i - c / 2.0) + salt
        running_mean = 0.05 * jnp.sin(i + salt)
        running_var = 1.0 + 0.1 * (i % 4)
        scale = gamma / jnp.sqrt(running_var + eps)
        shift = beta - running_mean * scale
        return scale.reshape(1, c), shift.reshape(1, c)

    s_up, b_up = bn_fold(out_channels, 0.0)
    s_lat, b_lat = bn_fold(out_channels, 0.5)
    return dict(w_up=w_up, s_up=s_up, b_up=b_up,
                w_lat=w_lat, s_lat=s_lat, b_lat=b_lat)


# ---------------------------------------------------------------------------
# Pure-JAX reference (f32) for a correctness sanity check
# ---------------------------------------------------------------------------
def _reference(x, p, x_old, p_old, params):
    xu = jax.nn.relu(jnp.einsum("bnc,cd->bnd", x, params["w_up"])
                     * params["s_up"] + params["b_up"])
    xl = jax.nn.relu(jnp.einsum("bmc,cd->bmd", x_old, params["w_lat"])
                     * params["s_lat"] + params["b_lat"])
    d2 = jnp.sum((p_old[:, :, None, :] - p[:, None, :, :]) ** 2, axis=-1)   # (B,M,N)
    _, idx = jax.lax.top_k(-d2, 3)                                          # (B,M,3)
    dsel = jnp.take_along_axis(d2, idx, axis=-1)
    w = 1.0 / jnp.clip(dsel, 1e-16)
    feats = jax.vmap(lambda f, i: f[i])(xu, idx)                            # (B,M,3,C)
    interp = jnp.sum(w[..., None] * feats, axis=2) / jnp.sum(w, axis=2, keepdims=True)
    return interp + xl


if __name__ == "__main__":
    B, N, M = 2, 8, 16          # N (coarse) < M (fine), as in the module docstring
    in_channels, out_channels = 32, 16

    key = jax.random.PRNGKey(0)
    kx, kp, kxo, kpo, kparam = jax.random.split(key, 5)

    x = jax.random.normal(kx, (B, N, in_channels), jnp.float32)
    p = jax.random.normal(kp, (B, N, 3), jnp.float32)
    x_old = jax.random.normal(kxo, (B, M, out_channels), jnp.float32)
    p_old = jax.random.normal(kpo, (B, M, 3), jnp.float32)

    params = make_params(kparam, in_channels, out_channels)

    fn = jax.jit(functools.partial(transition_up, params=params))
    y, p_out = fn(x, p, x_old, p_old)
    jax.block_until_ready(y)
    jax.block_until_ready(p_out)

    assert y.shape == (B, M, out_channels)
    assert p_out.shape == (B, M, 3)
    assert bool(jnp.all(jnp.isfinite(y)))

    y_ref = _reference(x, p, x_old, p_old, params)
    rel_err = float(jnp.max(jnp.abs(y - y_ref)) / (jnp.max(jnp.abs(y_ref)) + 1e-6))
    assert rel_err < 5e-2, f"kernel/reference mismatch: rel_err={rel_err}"

    print("KERNEL_OK")
</pallas_src>

<mosaic_0001>
module attributes {stable_mosaic.version = 11 : i64} {
  func.func @_up_mlp_kernel(%arg0: i32, %arg1: i32, %arg2: memref<1x128x128xbf16, #tpu.memory_space<vmem>>, %arg3: memref<128x128xbf16, #tpu.memory_space<vmem>>, %arg4: memref<1x128xf32, #tpu.memory_space<vmem>>, %arg5: memref<1x128x128xbf16, #tpu.memory_space<vmem>>) attributes {dimension_semantics = [#tpu.dimension_semantics<parallel>, #tpu.dimension_semantics<parallel>], iteration_bounds = array<i64: 2, 1>, scalar_prefetch = 0 : i64, scratch_operands = 0 : i64, tpu.core_type = #tpu.core_type<tc>, window_params = [{transform_indices = @transform_0, window_bounds = array<i64: 1, 128, 128>}, {pipeline_mode = #tpu.pipeline_mode<synchronous>, transform_indices = @transform_1, window_bounds = array<i64: 128, 128>}, {pipeline_mode = #tpu.pipeline_mode<synchronous>, transform_indices = @transform_2, window_bounds = array<i64: 1, 128>}, {transform_indices = @transform_3, window_bounds = array<i64: 1, 128, 128>}]} {
    %c0 = arith.constant 0 : index
    %c0_0 = arith.constant 0 : index
    %c0_1 = arith.constant 0 : index
    %0 = vector.load %arg2[%c0, %c0_0, %c0_1] : memref<1x128x128xbf16, #tpu.memory_space<vmem>>, vector<1x128x128xbf16>
    %1 = vector.shape_cast %0 : vector<1x128x128xbf16> to vector<128x128xbf16>
    %c0_2 = arith.constant 0 : index
    %c0_3 = arith.constant 0 : index
    %2 = vector.load %arg3[%c0_2, %c0_3] : memref<128x128xbf16, #tpu.memory_space<vmem>>, vector<128x128xbf16>
    %cst = arith.constant dense<0.000000e+00> : vector<128x128xf32>
    %3 = tpu.matmul %1, %2, %cst {dimension_numbers = #tpu.dot_dimension_numbers<[1], [0], [0], [1], [0, 0, 1, 1], [], []>} : vector<128x128xbf16>, vector<128x128xbf16>, vector<128x128xf32> -> vector<128x128xf32>
    %c0_4 = arith.constant 0 : index
    %c0_5 = arith.constant 0 : index
    %4 = vector.load %arg4[%c0_4, %c0_5] : memref<1x128xf32, #tpu.memory_space<vmem>>, vector<1x128xf32>
    %5 = vector.broadcast %4 : vector<1x128xf32> to vector<128x128xf32>
    %6 = arith.addf %3, %5 : vector<128x128xf32>
    %cst_6 = arith.constant 0.000000e+00 : f32
    %7 = vector.broadcast %cst_6 : f32 to vector<128x128xf32>
    %8 = arith.maximumf %6, %7 : vector<128x128xf32>
    %9 = arith.truncf %8 : vector<128x128xf32> to vector<128x128xbf16>
    %c0_7 = arith.constant 0 : index
    %c0_8 = arith.constant 0 : index
    %c0_9 = arith.constant 0 : index
    %10 = vector.load %arg5[%c0_7, %c0_8, %c0_9] : memref<1x128x128xbf16, #tpu.memory_space<vmem>>, vector<1x128x128xbf16>
    %11 = vector.shape_cast %10 : vector<1x128x128xbf16> to vector<128x128xbf16>
    %12 = vector.shape_cast %9 : vector<128x128xbf16> to vector<1x128x128xbf16>
    tpu.vector_store %arg5[%c0_7, %c0_8, %c0_9], %12 {strides = array<i32>} : memref<1x128x128xbf16, #tpu.memory_space<vmem>>, vector<1x128x128xbf16>,
    return
  }
  func.func @transform_0(%arg0: i32, %arg1: i32) -> (i32, i32, i32) {
    %c0_i32 = arith.constant 0 : i32
    %c0_i32_0 = arith.constant 0 : i32
    return %arg0, %arg1, %c0_i32 : i32, i32, i32
  }
  func.func @transform_1(%arg0: i32, %arg1: i32) -> (i32, i32) {
    %c0_i32 = arith.constant 0 : i32
    %c0_i32_0 = arith.constant 0 : i32
    %c0_i32_1 = arith.constant 0 : i32
    return %c0_i32, %c0_i32_0 : i32, i32
  }
  func.func @transform_2(%arg0: i32, %arg1: i32) -> (i32, i32) {
    %c0_i32 = arith.constant 0 : i32
    %c0_i32_0 = arith.constant 0 : i32
    %c0_i32_1 = arith.constant 0 : i32
    return %c0_i32, %c0_i32_0 : i32, i32
  }
  func.func @transform_3(%arg0: i32, %arg1: i32) -> (i32, i32, i32) {
    %c0_i32 = arith.constant 0 : i32
    %c0_i32_0 = arith.constant 0 : i32
    return %arg0, %arg1, %c0_i32 : i32, i32, i32
  }
}

module attributes {stable_mosaic.version = 11 : i64} {
  func.func @_interp_lateral_kernel(%arg0: i32, %arg1: i32, %arg2: memref<1x128x128xbf16, #tpu.memory_space<vmem>>, %arg3: memref<1x3x128xf32, #tpu.memory_space<vmem>>, %arg4: memref<1x16x128xbf16, #tpu.memory_space<vmem>>, %arg5: memref<1x16x3xf32, #tpu.memory_space<vmem>>, %arg6: memref<128x128xbf16, #tpu.memory_space<vmem>>, %arg7: memref<1x128xf32, #tpu.memory_space<vmem>>, %arg8: memref<1x16x128xbf16, #tpu.memory_space<vmem>>) attributes {dimension_semantics = [#tpu.dimension_semantics<parallel>, #tpu.dimension_semantics<parallel>], iteration_bounds = array<i64: 2, 1>, scalar_prefetch = 0 : i64, scratch_operands = 0 : i64, tpu.core_type = #tpu.core_type<tc>, window_params = [{transform_indices = @transform_0, window_bounds = array<i64: 1, 128, 128>}, {transform_indices = @transform_1, window_bounds = array<i64: 1, 3, 128>}, {transform_indices = @transform_2, window_bounds = array<i64: 1, 16, 128>}, {transform_indices = @transform_3, window_bounds = array<i64: 1, 16, 3>}, {pipeline_mode = #tpu.pipeline_mode<synchronous>, transform_indices = @transform_4, window_bounds = array<i64: 128, 128>}, {pipeline_mode = #tpu.pipeline_mode<synchronous>, transform_indices = @transform_5, window_bounds = array<i64: 1, 128>}, {transform_indices = @transform_6, window_bounds = array<i64: 1, 16, 128>}]} {
    %c0 = arith.constant 0 : index
    %c0_0 = arith.constant 0 : index
    %c0_1 = arith.constant 0 : index
    %0 = vector.load %arg5[%c0, %c0_0, %c0_1] : memref<1x16x3xf32, #tpu.memory_space<vmem>>, vector<1x16x3xf32>
    %1 = vector.shape_cast %0 : vector<1x16x3xf32> to vector<16x3xf32>
    %cst = arith.constant 1.000000e+30 : f32
    %2 = vector.broadcast %cst : f32 to vector<16x1xf32>
    %cst_2 = arith.constant 1.000000e+30 : f32
    %c0_i32 = arith.constant 0 : i32
    %c128_i32 = arith.constant 128 : i32
    %3 = arith.muli %c0_i32, %c128_i32 : i32
    %4 = tpu.assume_multiple %3, 128 : i32
    %c0_3 = arith.constant 0 : index
    %c0_4 = arith.constant 0 : index
    %5 = arith.index_cast %4 : i32 to index
    %6 = vector.load %arg3[%c0_3, %c0_4, %5] : memref<1x3x128xf32, #tpu.memory_space<vmem>>, vector<1x3x128xf32>
    %7 = vector.shape_cast %6 : vector<1x3x128xf32> to vector<3x128xf32>
    %8 = vector.extract_strided_slice %1 {offsets = [0, 0], sizes = [16, 1], strides = [1, 1]} : vector<16x3xf32> to vector<16x1xf32>
    %9 = vector.extract_strided_slice %7 {offsets = [0, 0], sizes = [1, 128], strides = [1, 1]} : vector<3x128xf32> to vector<1x128xf32>
    %10 = vector.broadcast %8 : vector<16x1xf32> to vector<16x128xf32>
    %11 = vector.broadcast %9 : vector<1x128xf32> to vector<16x128xf32>
    %12 = arith.subf %10, %11 : vector<16x128xf32>
    %13 = arith.mulf %12, %12 : vector<16x128xf32>
    %14 = vector.extract_strided_slice %1 {offsets = [0, 1], sizes = [16, 1], strides = [1, 1]} : vector<16x3xf32> to vector<16x1xf32>
    %15 = vector.extract_strided_slice %7 {offsets = [1, 0], sizes = [1, 128], strides = [1, 1]} : vector<3x128xf32> to vector<1x128xf32>
    %16 = vector.broadcast %14 : vector<16x1xf32> to vector<16x128xf32>
    %17 = vector.broadcast %15 : vector<1x128xf32> to vector<16x128xf32>
    %18 = arith.subf %16, %17 : vector<16x128xf32>
    %19 = arith.mulf %18, %18 : vector<16x128xf32>
    %20 = arith.addf %13, %19 : vector<16x128xf32>
    %21 = vector.extract_strided_slice %1 {offsets = [0, 2], sizes = [16, 1], strides = [1, 1]} : vector<16x3xf32> to vector<16x1xf32>
    %22 = vector.extract_strided_slice %7 {offsets = [2, 0], sizes = [1, 128], strides = [1, 1]} : vector<3x128xf32> to vector<1x128xf32>
    %23 = vector.broadcast %21 : vector<16x1xf32> to vector<16x128xf32>
    %24 = vector.broadcast %22 : vector<1x128xf32> to vector<16x128xf32>
    %25 = arith.subf %23, %24 : vector<16x128xf32>
    %26 = arith.mulf %25, %25 : vector<16x128xf32>
    %27 = arith.addf %20, %26 : vector<16x128xf32>
    %28 = tpu.iota {dimensions = array<i32: 1>} : vector<16x128xi32>
    %29 = vector.broadcast %4 : i32 to vector<16x128xi32>
    %30 = arith.addi %29, %28 : vector<16x128xi32>
    %c8_i32 = arith.constant 8 : i32
    %31 = vector.broadcast %c8_i32 : i32 to vector<16x128xi32>
    %32 = arith.cmpi slt, %30, %31 : vector<16x128xi32>
    %33 = vector.broadcast %cst_2 : f32 to vector<16x128xf32>
    %34 = arith.select %32, %27, %33 : vector<16x128xi1>, vector<16x128xf32>
    %cst_5 = arith.constant dense<0x7F800000> : vector<16xf32>
    %35 = vector.multi_reduction <minimumf>, %34, %cst_5 [1] : vector<16x128xf32> to vector<16xf32>
    %36 = vector.shape_cast %35 : vector<16xf32> to vector<16x1xf32>
    %37 = vector.broadcast %36 : vector<16x1xf32> to vector<16x128xf32>
    %38 = arith.cmpf ole, %34, %37 : vector<16x128xf32>
    %39 = vector.broadcast %cst_2 : f32 to vector<16x128xf32>
    %40 = arith.select %38, %39, %34 : vector<16x128xi1>, vector<16x128xf32>
    %cst_6 = arith.constant dense<0x7F800000> : vector<16xf32>
    %41 = vector.multi_reduction <minimumf>, %40, %cst_6 [1] : vector<16x128xf32> to vector<16xf32>
    %42 = vector.shape_cast %41 : vector<16xf32> to vector<16x1xf32>
    %43 = vector.broadcast %42 : vector<16x1xf32> to vector<16x128xf32>
    %44 = arith.cmpf ole, %40, %43 : vector<16x128xf32>
    %45 = vector.broadcast %cst_2 : f32 to vector<16x128xf32>
    %46 = arith.select %44, %45, %40 : vector<16x128xi1>, vector<16x128xf32>
    %cst_7 = arith.constant dense<0x7F800000> : vector<16xf32>
    %47 = vector.multi_reduction <minimumf>, %46, %cst_7 [1] : vector<16x128xf32> to vector<16xf32>
    %48 = vector.shape_cast %47 : vector<16xf32> to vector<16x1xf32>
    %49 = arith.minimumf %2, %36 : vector<16x1xf32>
    %50 = arith.minimumf %2, %42 : vector<16x1xf32>
    %51 = arith.maximumf %2, %36 : vector<16x1xf32>
    %52 = arith.minimumf %50, %51 : vector<16x1xf32>
    %53 = arith.minimumf %2, %48 : vector<16x1xf32>
    %54 = arith.maximumf %2, %42 : vector<16x1xf32>
    %55 = arith.maximumf %2, %36 : vector<16x1xf32>
    %56 = arith.minimumf %54, %55 : vector<16x1xf32>
    %57 = arith.minimumf %53, %56 : vector<16x1xf32>
    %c1_i32 = arith.constant 1 : i32
    %cst_8 = arith.constant 0.000000e+00 : f32
    %58 = vector.broadcast %cst_8 : f32 to vector<16x128xf32>
    %cst_9 = arith.constant 1.000000e+30 : f32
    %c0_i32_10 = arith.constant 0 : i32
    %c128_i32_11 = arith.constant 128 : i32
    %59 = arith.muli %c0_i32_10, %c128_i32_11 : i32
    %60 = tpu.assume_multiple %59, 128 : i32
    %c0_12 = arith.constant 0 : index
    %c0_13 = arith.constant 0 : index
    %61 = arith.index_cast %60 : i32 to index
    %62 = vector.load %arg3[%c0_12, %c0_13, %61] : memref<1x3x128xf32, #tpu.memory_space<vmem>>, vector<1x3x128xf32>
    %63 = vector.shape_cast %62 : vector<1x3x128xf32> to vector<3x128xf32>
    %64 = vector.extract_strided_slice %1 {offsets = [0, 0], sizes = [16, 1], strides = [1, 1]} : vector<16x3xf32> to vector<16x1xf32>
    %65 = vector.extract_strided_slice %63 {offsets = [0, 0], sizes = [1, 128], strides = [1, 1]} : vector<3x128xf32> to vector<1x128xf32>
    %66 = vector.broadcast %64 : vector<16x1xf32> to vector<16x128xf32>
    %67 = vector.broadcast %65 : vector<1x128xf32> to vector<16x128xf32>
    %68 = arith.subf %66, %67 : vector<16x128xf32>
    %69 = arith.mulf %68, %68 : vector<16x128xf32>
    %70 = vector.extract_strided_slice %1 {offsets = [0, 1], sizes = [16, 1], strides = [1, 1]} : vector<16x3xf32> to vector<16x1xf32>
    %71 = vector.extract_strided_slice %63 {offsets = [1, 0], sizes = [1, 128], strides = [1, 1]} : vector<3x128xf32> to vector<1x128xf32>
    %72 = vector.broadcast %70 : vector<16x1xf32> to vector<16x128xf32>
    %73 = vector.broadcast %71 : vector<1x128xf32> to vector<16x128xf32>
    %74 = arith.subf %72, %73 : vector<16x128xf32>
    %75 = arith.mulf %74, %74 : vector<16x128xf32>
    %76 = arith.addf %69, %75 : vector<16x128xf32>
    %77 = vector.extract_strided_slice %1 {offsets = [0, 2], sizes = [16, 1], strides = [1, 1]} : vector<16x3xf32> to vector<16x1xf32>
    %78 = vector.extract_strided_slice %63 {offsets = [2, 0], sizes = [1, 128], strides = [1, 1]} : vector<3x128xf32> to vector<1x128xf32>
    %79 = vector.broadcast %77 : vector<16x1xf32> to vector<16x128xf32>
    %80 = vector.broadcast %78 : vector<1x128xf32> to vector<16x128xf32>
    %81 = arith.subf %79, %80 : vector<16x128xf32>
    %82 = arith.mulf %81, %81 : vector<16x128xf32>
    %83 = arith.addf %76, %82 : vector<16x128xf32>
    %84 = tpu.iota {dimensions = array<i32: 1>} : vector<16x128xi32>
    %85 = vector.broadcast %60 : i32 to vector<16x128xi32>
    %86 = arith.addi %85, %84 : vector<16x128xi32>
    %c8_i32_14 = arith.constant 8 : i32
    %87 = vector.broadcast %c8_i32_14 : i32 to vector<16x128xi32>
    %88 = arith.cmpi slt, %86, %87 : vector<16x128xi32>
    %89 = vector.broadcast %cst_9 : f32 to vector<16x128xf32>
    %90 = arith.select %88, %83, %89 : vector<16x128xi1>, vector<16x128xf32>
    %cst_15 = arith.constant 1.000000e-16 : f32
    %91 = vector.broadcast %cst_15 : f32 to vector<16x128xf32>
    %92 = arith.maximumf %90, %91 : vector<16x128xf32>
    %93 = tpu.reciprocal %92 {approx = true} : vector<16x128xf32> -> vector<16x128xf32>
    %94 = vector.broadcast %57 : vector<16x1xf32> to vector<16x128xf32>
    %95 = arith.cmpf ole, %90, %94 : vector<16x128xf32>
    %cst_16 = arith.constant 0.000000e+00 : f32
    %96 = vector.broadcast %cst_16 : f32 to vector<16x128xf32>
    %97 = arith.select %95, %93, %96 : vector<16x128xi1>, vector<16x128xf32>
    %98 = arith.truncf %97 : vector<16x128xf32> to vector<16x128xbf16>
    %c128_i32_17 = arith.constant 128 : i32
    %99 = arith.muli %c0_i32_10, %c128_i32_17 : i32
    %100 = tpu.assume_multiple %99, 128 : i32
    %c0_18 = arith.constant 0 : index
    %101 = arith.index_cast %100 : i32 to index
    %c0_19 = arith.constant 0 : index
    %102 = vector.load %arg2[%c0_18, %101, %c0_19] : memref<1x128x128xbf16, #tpu.memory_space<vmem>>, vector<1x128x128xbf16>
    %103 = vector.shape_cast %102 : vector<1x128x128xbf16> to vector<128x128xbf16>
    %cst_20 = arith.constant dense<0.000000e+00> : vector<16x128xf32>
    %104 = tpu.matmul %98, %103, %cst_20 {dimension_numbers = #tpu.dot_dimension_numbers<[1], [0], [0], [1], [0, 0, 1, 1], [], []>} : vector<16x128xbf16>, vector<128x128xbf16>, vector<16x128xf32> -> vector<16x128xf32>
    %105 = arith.addf %58, %104 : vector<16x128xf32>
    %c1_i32_21 = arith.constant 1 : i32
    %106 = vector.extract_strided_slice %105 {offsets = [0, 16], sizes = [16, 1], strides = [1, 1]} : vector<16x128xf32> to vector<16x1xf32>
    %cst_22 = arith.constant 1.000000e-30 : f32
    %107 = vector.broadcast %cst_22 : f32 to vector<16x1xf32>
    %108 = arith.maximumf %106, %107 : vector<16x1xf32>
    %109 = tpu.reciprocal %108 {approx = true} : vector<16x1xf32> -> vector<16x1xf32>
    %110 = vector.broadcast %109 : vector<16x1xf32> to vector<16x128xf32>
    %111 = arith.mulf %105, %110 : vector<16x128xf32>
    %c0_23 = arith.constant 0 : index
    %c0_24 = arith.constant 0 : index
    %c0_25 = arith.constant 0 : index
    %112 = vector.load %arg4[%c0_23, %c0_24, %c0_25] : memref<1x16x128xbf16, #tpu.memory_space<vmem>>, vector<1x16x128xbf16>
    %113 = vector.shape_cast %112 : vector<1x16x128xbf16> to vector<16x128xbf16>
    %c0_26 = arith.constant 0 : index
    %c0_27 = arith.constant 0 : index
    %114 = vector.load %arg6[%c0_26, %c0_27] : memref<128x128xbf16, #tpu.memory_space<vmem>>, vector<128x128xbf16>
    %cst_28 = arith.constant dense<0.000000e+00> : vector<16x128xf32>
    %115 = tpu.matmul %113, %114, %cst_28 {dimension_numbers = #tpu.dot_dimension_numbers<[1], [0], [0], [1], [0, 0, 1, 1], [], []>} : vector<16x128xbf16>, vector<128x128xbf16>, vector<16x128xf32> -> vector<16x128xf32>
    %c0_29 = arith.constant 0 : index
    %c0_30 = arith.constant 0 : index
    %116 = vector.load %arg7[%c0_29, %c0_30] : memref<1x128xf32, #tpu.memory_space<vmem>>, vector<1x128xf32>
    %117 = vector.broadcast %116 : vector<1x128xf32> to vector<16x128xf32>
    %118 = arith.addf %115, %117 : vector<16x128xf32>
    %cst_31 = arith.constant 0.000000e+00 : f32
    %119 = vector.broadcast %cst_31 : f32 to vector<16x128xf32>
    %120 = arith.maximumf %118, %119 : vector<16x128xf32>
    %121 = arith.addf %111, %120 : vector<16x128xf32>
    %122 = arith.truncf %121 : vector<16x128xf32> to vector<16x128xbf16>
    %c0_32 = arith.constant 0 : index
    %c0_33 = arith.constant 0 : index
    %c0_34 = arith.constant 0 : index
    %123 = vector.load %arg8[%c0_32, %c0_33, %c0_34] : memref<1x16x128xbf16, #tpu.memory_space<vmem>>, vector<1x16x128xbf16>
    %124 = vector.shape_cast %123 : vector<1x16x128xbf16> to vector<16x128xbf16>
    %125 = vector.shape_cast %122 : vector<16x128xbf16> to vector<1x16x128xbf16>
    tpu.vector_store %arg8[%c0_32, %c0_33, %c0_34], %125 {strides = array<i32>} : memref<1x16x128xbf16, #tpu.memory_space<vmem>>, vector<1x16x128xbf16>,
    return
  }
  func.func @transform_0(%arg0: i32, %arg1: i32) -> (i32, i32, i32) {
    %c0_i32 = arith.constant 0 : i32
    %c0_i32_0 = arith.constant 0 : i32
    %c0_i32_1 = arith.constant 0 : i32
    return %arg0, %c0_i32, %c0_i32_0 : i32, i32, i32
  }
  func.func @transform_1(%arg0: i32, %arg1: i32) -> (i32, i32, i32) {
    %c0_i32 = arith.constant 0 : i32
    %c0_i32_0 = arith.constant 0 : i32
    %c0_i32_1 = arith.constant 0 : i32
    return %arg0, %c0_i32, %c0_i32_0 : i32, i32, i32
  }
  func.func @transform_2(%arg0: i32, %arg1: i32) -> (i32, i32, i32) {
    %c0_i32 = arith.constant 0 : i32
    %c0_i32_0 = arith.constant 0 : i32
    return %arg0, %arg1, %c0_i32 : i32, i32, i32
  }
  func.func @transform_3(%arg0: i32, %arg1: i32) -> (i32, i32, i32) {
    %c0_i32 = arith.constant 0 : i32
    %c0_i32_0 = arith.constant 0 : i32
    return %arg0, %arg1, %c0_i32 : i32, i32, i32
  }
  func.func @transform_4(%arg0: i32, %arg1: i32) -> (i32, i32) {
    %c0_i32 = arith.constant 0 : i32
    %c0_i32_0 = arith.constant 0 : i32
    %c0_i32_1 = arith.constant 0 : i32
    return %c0_i32, %c0_i32_0 : i32, i32
  }
  func.func @transform_5(%arg0: i32, %arg1: i32) -> (i32, i32) {
    %c0_i32 = arith.constant 0 : i32
    %c0_i32_0 = arith.constant 0 : i32
    %c0_i32_1 = arith.constant 0 : i32
    return %c0_i32, %c0_i32_0 : i32, i32
  }
  func.func @transform_6(%arg0: i32, %arg1: i32) -> (i32, i32, i32) {
    %c0_i32 = arith.constant 0 : i32
    %c0_i32_0 = arith.constant 0 : i32
    return %arg0, %arg1, %c0_i32 : i32, i32, i32
  }
}

</mosaic_0001>

<llo_original>
// kernel: transition_up.2
$region0: #{transition_up.2}
  #allocation0 [shape = 'u32[]', space=smem, size = 0x4, offset = 0x4, fixed_abs, tag = 'smem constant byte address 0x4 - core index']
  #allocation1 [shape = 'u32[72,128]{1,0:T(1,128)}', space=vmem, size = 0x9000, scoped, tag = 'internal scratch']
  %s0 = inlined_call_operand.vmem [shape: bf16[2,128,128], index: 0, kind: input, shape index: {}]
  %s1 = inlined_call_operand.vmem [shape: bf16[128,128], index: 1, kind: input, shape index: {}]
  %s2 = inlined_call_operand.vmem [shape: f32[1,128], index: 2, kind: input, shape index: {}]
  %s3 = inlined_call_operand.vmem [shape: bf16[2,128,128], index: 3, kind: output, shape index: {}]
  %s4 = sld [smem:[#allocation0]]
  $region45: #{transition_up.2} parent=0
    _
  %s6 = ssub.s32 1, %s4
  %s7 = scalar_select 0, %s6, %s4
  loop: start=0, step=1, limit=4
  $region2: #{transition_up.2} parent=0 // loop_pre_header
    _
  $region3: #{transition_up.2} parent=0 // loop_header
    %s9 = sphi 0, %s13
    %p10 = scmp.ge.s32.totalorder %s9, 4
    %s16 = sphi 0, %s28
    %s17 = sphi 0, %s24
    %s18 = sphi 0, %s16
    %s19 = sphi 0, %s17
    %s20 = sphi 0, %s18
    %s21 = sphi 0, %s19
    %s33 = sphi 0, %s35
    %s36 = sphi 0, %s33
    %s37 = sphi 0, %s36
    %s53 = sphi 0, %s37
    %s57 = sphi 0, %s57
    %s59 = sphi 0, %s57
    %s60 = sphi 0, %s59
    %s74 = sphi 0, %s60
    %s78 = sphi 0, %s78
    %s80 = sphi 0, %s78
    %s81 = sphi 0, %s80
    %s95 = sphi 0, %s81
    %s103 = sphi 0, %s105
    %s106 = sphi 0, %s103
    %s107 = sphi 0, %s106
    %s123 = sphi 0, %s107
  $region4: #{transition_up.2} parent=0 // loop_header_branch
    %12 = sbr.rel (%p10) target = $region8
  $region5: #{transition_up.2} parent=0 // loop_body
    %s14 = ssub.s32 %s9, 1
    %s15 = ssub.s32 %s9, 2
    %s22 = sadd.s32 1, %s17
    %p23 = scmp.ge.s32.totalorder %s22, 1
    %s24 = scalar_select %p23, 0, %s22
    %s25 = sadd.s32 1, %s16
    %s26 = scalar_select %p23, %s25, %s16
    %p27 = scmp.ge.s32.totalorder %s26, 2
    %s28 = scalar_select %p27, 0, %s26
    %s29 = ssub.s32 %s16, %s28
    %s30 = ssub.s32 %s17, %s24
    %s31 = sor.u32 %s29, %s30
    %p32 = scmp.eq.s32.totalorder %s31, 0
    %s34 = sadd.s32 %s33, 1
    %s35 = scalar_select %p32, %s33, %s34
    %p38 = pneg %p32
    %p39 = scmp.eq.s32.totalorder %s9, 1
    %p40 = por %p38, %p39
    %p41 = scmp.ne.s32.totalorder %s33, %s36
    %p42 = scmp.eq.s32.totalorder %s9, 0
    %p43 = por %p41, %p42
    %p44 = scmp.ne.s32.totalorder %s33, %s36
    %p45 = scmp.eq.s32.totalorder %s14, 1
    %p46 = por %p44, %p45
    %p47 = scmp.ne.s32.totalorder %s36, %s37
    %p48 = scmp.eq.s32.totalorder %s14, 0
    %p49 = por %p47, %p48
    %p50 = scmp.ne.s32.totalorder %s36, %s37
    %p51 = scmp.eq.s32.totalorder %s15, 1
    %p52 = por %p50, %p51
    %p54 = scmp.ne.s32.totalorder %s37, %s53
    %p55 = scmp.eq.s32.totalorder %s15, 0
    %p56 = por %p54, %p55
    %s58 = sadd.s32 %s57, 1
    %p61 = scmp.eq.s32.totalorder %s9, 1
    %p62 = scmp.ne.s32.totalorder %s57, %s59
    %p63 = scmp.eq.s32.totalorder %s9, 0
    %p64 = por %p62, %p63
    %p65 = scmp.ne.s32.totalorder %s57, %s59
    %p66 = scmp.eq.s32.totalorder %s14, 1
    %p67 = por %p65, %p66
    %p68 = scmp.ne.s32.totalorder %s59, %s60
    %p69 = scmp.eq.s32.totalorder %s14, 0
    %p70 = por %p68, %p69
    %p71 = scmp.ne.s32.totalorder %s59, %s60
    %p72 = scmp.eq.s32.totalorder %s15, 1
    %p73 = por %p71, %p72
    %p75 = scmp.ne.s32.totalorder %s60, %s74
    %p76 = scmp.eq.s32.totalorder %s15, 0
    %p77 = por %p75, %p76
    %s79 = sadd.s32 %s78, 1
    %p82 = scmp.eq.s32.totalorder %s9, 1
    %p83 = scmp.ne.s32.totalorder %s78, %s80
    %p84 = scmp.eq.s32.totalorder %s9, 0
    %p85 = por %p83, %p84
    %p86 = scmp.ne.s32.totalorder %s78, %s80
    %p87 = scmp.eq.s32.totalorder %s14, 1
    %p88 = por %p86, %p87
    %p89 = scmp.ne.s32.totalorder %s80, %s81
    %p90 = scmp.eq.s32.totalorder %s14, 0
    %p91 = por %p89, %p90
    %p92 = scmp.ne.s32.totalorder %s80, %s81
    %p93 = scmp.eq.s32.totalorder %s15, 1
    %p94 = por %p92, %p93
    %p96 = scmp.ne.s32.totalorder %s81, %s95
    %p97 = scmp.eq.s32.totalorder %s15, 0
    %p98 = por %p96, %p97
    %s99 = ssub.s32 %s16, %s28
    %s100 = ssub.s32 %s17, %s24
    %s101 = sor.u32 %s99, %s100
    %p102 = scmp.eq.s32.totalorder %s101, 0
    %s104 = sadd.s32 %s103, 1
    %s105 = scalar_select %p102, %s103, %s104
    %p108 = pneg %p102
    %p109 = scmp.eq.s32.totalorder %s9, 1
    %p110 = por %p108, %p109
    %p111 = scmp.ne.s32.totalorder %s103, %s106
    %p112 = scmp.eq.s32.totalorder %s9, 0
    %p113 = por %p111, %p112
    %p114 = scmp.ne.s32.totalorder %s103, %s106
    %p115 = scmp.eq.s32.totalorder %s14, 1
    %p116 = por %p114, %p115
    %p117 = scmp.ne.s32.totalorder %s106, %s107
    %p118 = scmp.eq.s32.totalorder %s14, 0
    %p119 = por %p117, %p118
    %p120 = scmp.ne.s32.totalorder %s106, %s107
    %p121 = scmp.eq.s32.totalorder %s15, 1
    %p122 = por %p120, %p121
    %p124 = scmp.ne.s32.totalorder %s107, %s123
    %p125 = scmp.eq.s32.totalorder %s15, 0
    %p126 = por %p124, %p125
    %p127 = scmp.le.s32.totalorder 1, %s9
    %p128 = scmp.lt.s32.totalorder %s9, 3
    %p129 = pnand %p127, %p128
    %p130 = pneg %p129
    // Predicated region
    $region9: #{transition_up.2} parent=5 // pred_check
      _
    $region10: #{transition_up.2} parent=5 // pred_check_branch
      %132 = sbr.rel (%p129) target = $region12
    $region11: #{transition_up.2} parent=5 // pred_region
      %s133 = ssub.s32 %s9, 1
      // Predicated region
      $region13: #{transition_up.2} parent=11 // pred_check
        %p134 = pneg %p70
      $region14: #{transition_up.2} parent=11 // pred_check_branch
        %136 = sbr.rel (%p134) target = $region16
      $region15: #{transition_up.2} parent=11 // pred_region
        _
      $region16: #{transition_up.2} parent=11 // pred_fallthru
        _
      // Predicated region
      $region17: #{transition_up.2} parent=11 // pred_check
        %p137 = pneg %p91
      $region18: #{transition_up.2} parent=11 // pred_check_branch
        %139 = sbr.rel (%p137) target = $region20
      $region19: #{transition_up.2} parent=11 // pred_region
        _
      $region20: #{transition_up.2} parent=11 // pred_fallthru
        _
    $region12: #{transition_up.2} parent=5 // pred_fallthru
      _
    %p140 = scmp.lt.s32.totalorder %s9, 2
    // Predicated region
    $region21: #{transition_up.2} parent=5 // pred_check
      %p141 = pneg %p140
    $region22: #{transition_up.2} parent=5 // pred_check_branch
      %143 = sbr.rel (%p141) target = $region24
    $region23: #{transition_up.2} parent=5 // pred_region
      // Predicated region
      $region25: #{transition_up.2} parent=23 // pred_check
        %p144 = pneg %p43
      $region26: #{transition_up.2} parent=23 // pred_check_branch
        %146 = sbr.rel (%p144) target = $region28
      $region27: #{transition_up.2} parent=23 // pred_region
        %s147 = smul.u32 16, %s17
        %p148 = scmp.lt.s32.totalorder %s16, 1
        %s149 = scalar_select %p148, %s16, 1
        %p150 = scmp.lt.s32.totalorder %s147, 15
        %s151 = scalar_select %p150, %s147, 15
        %s152 = smul.addr %s149, 16
        %s153 = sadd.s32 %s151, %s152
        %s154 = smul.addr %s153, 4
        %s155 = scalar_lea.vmem %s0, %s154
        %s156 = smul.u32 16, %s17
      $region28: #{transition_up.2} parent=23 // pred_fallthru
        _
    $region24: #{transition_up.2} parent=5 // pred_fallthru
      _
    %p157 = scmp.le.s32.totalorder 1, %s9
    %p158 = scmp.lt.s32.totalorder %s9, 3
    %p159 = pnand %p157, %p158
    %p160 = pneg %p159
    // Predicated region
    $region29: #{transition_up.2} parent=5 // pred_check
      _
    $region30: #{transition_up.2} parent=5 // pred_check_branch
      %162 = sbr.rel (%p159) target = $region32
    $region31: #{transition_up.2} parent=5 // pred_region
      %s163 = ssub.s32 %s9, 1
      %s164 = smul.u32 16, %s19
      %p165 = scmp.lt.s32.totalorder %s18, 1
      %s166 = scalar_select %p165, %s18, 1
      %p167 = scmp.lt.s32.totalorder %s164, 15
      %s168 = scalar_select %p167, %s164, 15
      %s169 = smul.addr %s166, 16
      %s170 = sadd.s32 %s168, %s169
      %s171 = smul.addr %s170, 4
      %s172 = scalar_lea.vmem %s0, %s171
      %p173 = pneg %p49
      %p174 = pneg %p46
      %p175 = pneg %p70
      %p176 = pneg %p67
      %p177 = pneg %p91
      %p178 = pneg %p88
      %p179 = pneg %p119
      %p180 = pneg %p116
      %s181 = smul.u32 16, %s19
      %p182 = scmp.lt.s32.totalorder %s18, 1
      %s183 = scalar_select %p182, %s18, 1
      %p184 = scmp.lt.s32.totalorder %s181, 15
      %s185 = scalar_select %p184, %s181, 15
      %s186 = smul.addr %s183, 16
      %s187 = sadd.s32 %s185, %s186
      %s188 = smul.addr %s187, 4
      %s189 = scalar_lea.vmem %s3, %s188
      %s190 = smul.u32 16, %s19
      %p191 = scmp.lt.s32.totalorder %s18, 1
      %s192 = scalar_select %p191, %s18, 1
      %p193 = scmp.lt.s32.totalorder %s190, 15
      %s194 = scalar_select %p193, %s190, 15
      %s195 = smul.addr %s192, 16
      %s196 = sadd.s32 %s194, %s195
      %s197 = smul.addr %s196, 4
      %s198 = scalar_lea.vmem %s0, %s197
      %s199 = smul.u32 16, %s19
      %s200 = smul.u32 16, %s19
      %p201 = scmp.lt.s32.totalorder %s18, 1
      %s202 = scalar_select %p201, %s18, 1
      %p203 = scmp.lt.s32.totalorder %s200, 15
      %s204 = scalar_select %p203, %s200, 15
      %s205 = smul.addr %s202, 16
      %s206 = sadd.s32 %s204, %s205
      %s207 = smul.addr %s206, 4
      %s208 = scalar_lea.vmem %s3, %s207
      %s209 = smul.u32 16, %s19
      %v210 = vld [vmem:[%s198] sm:$0xf]
      %v211 = vld [vmem:[%s198 + $0x4] sm:$0xf]
      %v212 = vld [vmem:[%s198 + $0x8] sm:$0xf]
      %v213 = vld [vmem:[%s198 + $0xc] sm:$0xf]
      %v214 = vld [vmem:[%s198 + $0x10] sm:$0xf]
      %v215 = vld [vmem:[%s198 + $0x14] sm:$0xf]
      %v216 = vld [vmem:[%s198 + $0x18] sm:$0xf]
      %v217 = vld [vmem:[%s198 + $0x1c] sm:$0xf]
      %v218 = vld [vmem:[%s198 + $0x20] sm:$0xf]
      %v219 = vld [vmem:[%s198 + $0x24] sm:$0xf]
      %v220 = vld [vmem:[%s198 + $0x28] sm:$0xf]
      %v221 = vld [vmem:[%s198 + $0x2c] sm:$0xf]
      %v222 = vld [vmem:[%s198 + $0x30] sm:$0xf]
      %v223 = vld [vmem:[%s198 + $0x34] sm:$0xf]
      %v224 = vld [vmem:[%s198 + $0x38] sm:$0xf]
      %v225 = vld [vmem:[%s198 + $0x3c] sm:$0xf]
      %v226 = vld [vmem:[%s1] sm:$0xf]
      %v227 = vld [vmem:[%s1 + $0x4] sm:$0xf]
      %v228 = vld [vmem:[%s1 + $0x8] sm:$0xf]
      %v229 = vld [vmem:[%s1 + $0xc] sm:$0xf]
      %v230 = vld [vmem:[%s1 + $0x10] sm:$0xf]
      %v231 = vld [vmem:[%s1 + $0x14] sm:$0xf]
      %v232 = vld [vmem:[%s1 + $0x18] sm:$0xf]
      %v233 = vld [vmem:[%s1 + $0x1c] sm:$0xf]
      %v234 = vld [vmem:[%s1 + $0x20] sm:$0xf]
      %v235 = vld [vmem:[%s1 + $0x24] sm:$0xf]
      %v236 = vld [vmem:[%s1 + $0x28] sm:$0xf]
      %v237 = vld [vmem:[%s1 + $0x2c] sm:$0xf]
      %v238 = vld [vmem:[%s1 + $0x30] sm:$0xf]
      %v239 = vld [vmem:[%s1 + $0x34] sm:$0xf]
      %v240 = vld [vmem:[%s1 + $0x38] sm:$0xf]
      %v241 = vld [vmem:[%s1 + $0x3c] sm:$0xf]
      %v242 = vld [vmem:[%s2] sm:$0x1]
      %v244 = vperm.slane %v242, 0
      %v262 = vunpack.c.l.b16 %v210
      %v263 = vunpack.c.l.b16 %v211
      %v264 = vunpack.c.l.b16 %v212
      %v265 = vunpack.c.l.b16 %v213
      %v266 = vunpack.c.l.b16 %v214
      %v267 = vunpack.c.l.b16 %v215
      %v268 = vunpack.c.l.b16 %v216
      %v269 = vunpack.c.l.b16 %v217
      %v270 = vunpack.c.l.b16 %v218
      %v271 = vunpack.c.l.b16 %v219
      %v272 = vunpack.c.l.b16 %v220
      %v273 = vunpack.c.l.b16 %v221
      %v274 = vunpack.c.l.b16 %v222
      %v275 = vunpack.c.l.b16 %v223
      %v276 = vunpack.c.l.b16 %v224
      %v277 = vunpack.c.l.b16 %v225
      %v278 = vpack.c.b16 %v263, %v262
      %v279 = vpack.c.b16 %v265, %v264
      %v280 = vpack.c.b16 %v267, %v266
      %v281 = vpack.c.b16 %v269, %v268
      %v282 = vpack.c.b16 %v271, %v270
      %v283 = vpack.c.b16 %v273, %v272
      %v284 = vpack.c.b16 %v275, %v274
      %v285 = vpack.c.b16 %v277, %v276
      %v310 = vunpack.c.l.b16 %v226
      %v311 = vunpack.c.l.b16 %v227
      %v312 = vunpack.c.l.b16 %v228
      %v313 = vunpack.c.l.b16 %v229
      %v314 = vunpack.c.l.b16 %v230
      %v315 = vunpack.c.l.b16 %v231
      %v316 = vunpack.c.l.b16 %v232
      %v317 = vunpack.c.l.b16 %v233
      %v318 = vunpack.c.l.b16 %v234
      %v319 = vunpack.c.l.b16 %v235
      %v320 = vunpack.c.l.b16 %v236
      %v321 = vunpack.c.l.b16 %v237
      %v322 = vunpack.c.l.b16 %v238
      %v323 = vunpack.c.l.b16 %v239
      %v324 = vunpack.c.l.b16 %v240
      %v325 = vunpack.c.l.b16 %v241
      %v326 = vpack.c.b16 %v311, %v310
      %v327 = vpack.c.b16 %v313, %v312
      %v328 = vpack.c.b16 %v315, %v314
      %v329 = vpack.c.b16 %v317, %v316
      %v330 = vpack.c.b16 %v319, %v318
      %v331 = vpack.c.b16 %v321, %v320
      %v332 = vpack.c.b16 %v323, %v322
      %v333 = vpack.c.b16 %v325, %v324
      %342 = vmatpush.bf16.msra.mxu0 %v333
      %343 = vmatpush.bf16.msra.mxu0 %v332
      %344 = vmatpush.bf16.msra.mxu0 %v331
      %345 = vmatpush.bf16.msra.mxu0 %v330
      %346 = vmatpush.bf16.msra.mxu0 %v329
      %347 = vmatpush.bf16.msra.mxu0 %v328
      %348 = vmatpush.bf16.msra.mxu0 %v327
      %349 = vmatpush.bf16.msra.mxu0 %v326
      %350 = vmatmul.bf16.gmra.mxu0 %v278
      %v351 = vpop.f32.mrf.mxu0
      %v352 = vadd.f32 %v244, %v351
      %v353 = vpop.f32.mrf.mxu0
      %v354 = vadd.f32 %v244, %v353
      %355 = vmatmul.bf16.gmra.mxu0 %v279
      %v356 = vpop.f32.mrf.mxu0
      %v357 = vadd.f32 %v244, %v356
      %v358 = vpop.f32.mrf.mxu0
      %v359 = vadd.f32 %v244, %v358
      %360 = vmatmul.bf16.gmra.mxu0 %v280
      %v361 = vpop.f32.mrf.mxu0
      %v362 = vadd.f32 %v244, %v361
      %v363 = vpop.f32.mrf.mxu0
      %v364 = vadd.f32 %v244, %v363
      %365 = vmatmul.bf16.gmra.mxu0 %v281
      %v366 = vpop.f32.mrf.mxu0
      %v367 = vadd.f32 %v244, %v366
      %v368 = vpop.f32.mrf.mxu0
      %v369 = vadd.f32 %v244, %v368
      %370 = vmatmul.bf16.gmra.mxu0 %v282
      %v371 = vpop.f32.mrf.mxu0
      %v372 = vadd.f32 %v244, %v371
      %v373 = vpop.f32.mrf.mxu0
      %v374 = vadd.f32 %v244, %v373
      %375 = vmatmul.bf16.gmra.mxu0 %v283
      %v376 = vpop.f32.mrf.mxu0
      %v377 = vadd.f32 %v244, %v376
      %v378 = vpop.f32.mrf.mxu0
      %v379 = vadd.f32 %v244, %v378
      %380 = vmatmul.bf16.gmra.mxu0 %v284
      %v381 = vpop.f32.mrf.mxu0
      %v382 = vadd.f32 %v244, %v381
      %v383 = vpop.f32.mrf.mxu0
      %v384 = vadd.f32 %v244, %v383
      %385 = vmatmul.bf16.gmra.mxu0 %v285
      %v386 = vpop.f32.mrf.mxu0
      %v387 = vadd.f32 %v244, %v386
      %v388 = vpop.f32.mrf.mxu0
      %v389 = vadd.f32 %v244, %v388
      %390 = vdwg.mxu0
      %v391 = vmax.f32 %v352, 0.0
      %v392 = vmax.f32 %v354, 0.0
      %v393 = vmax.f32 %v357, 0.0
      %v394 = vmax.f32 %v359, 0.0
      %v395 = vmax.f32 %v362, 0.0
      %v396 = vmax.f32 %v364, 0.0
      %v397 = vmax.f32 %v367, 0.0
      %v398 = vmax.f32 %v369, 0.0
      %v399 = vmax.f32 %v372, 0.0
      %v400 = vmax.f32 %v374, 0.0
      %v401 = vmax.f32 %v377, 0.0
      %v402 = vmax.f32 %v379, 0.0
      %v403 = vmax.f32 %v382, 0.0
      %v404 = vmax.f32 %v384, 0.0
      %v405 = vmax.f32 %v387, 0.0
      %v406 = vmax.f32 %v389, 0.0
      %v407 = vpack.c.bf16 %v391, %v391
      %v408 = vpack.c.bf16 %v392, %v392
      %v409 = vpack.c.bf16 %v393, %v393
      %v410 = vpack.c.bf16 %v394, %v394
      %v411 = vpack.c.bf16 %v395, %v395
      %v412 = vpack.c.bf16 %v396, %v396
      %v413 = vpack.c.bf16 %v397, %v397
      %v414 = vpack.c.bf16 %v398, %v398
      %v415 = vpack.c.bf16 %v399, %v399
      %v416 = vpack.c.bf16 %v400, %v400
      %v417 = vpack.c.bf16 %v401, %v401
      %v418 = vpack.c.bf16 %v402, %v402
      %v419 = vpack.c.bf16 %v403, %v403
      %v420 = vpack.c.bf16 %v404, %v404
      %v421 = vpack.c.bf16 %v405, %v405
      %v422 = vpack.c.bf16 %v406, %v406
      %423 = vst [vmem:[%s208] sm:$0xf] %v407
      %424 = vst [vmem:[%s208 + $0x4] sm:$0xf] %v408
      %425 = vst [vmem:[%s208 + $0x8] sm:$0xf] %v409
      %426 = vst [vmem:[%s208 + $0xc] sm:$0xf] %v410
      %427 = vst [vmem:[%s208 + $0x10] sm:$0xf] %v411
      %428 = vst [vmem:[%s208 + $0x14] sm:$0xf] %v412
      %429 = vst [vmem:[%s208 + $0x18] sm:$0xf] %v413
      %430 = vst [vmem:[%s208 + $0x1c] sm:$0xf] %v414
      %431 = vst [vmem:[%s208 + $0x20] sm:$0xf] %v415
      %432 = vst [vmem:[%s208 + $0x24] sm:$0xf] %v416
      %433 = vst [vmem:[%s208 + $0x28] sm:$0xf] %v417
      %434 = vst [vmem:[%s208 + $0x2c] sm:$0xf] %v418
      %435 = vst [vmem:[%s208 + $0x30] sm:$0xf] %v419
      %436 = vst [vmem:[%s208 + $0x34] sm:$0xf] %v420
      %437 = vst [vmem:[%s208 + $0x38] sm:$0xf] %v421
      %438 = vst [vmem:[%s208 + $0x3c] sm:$0xf] %v422
      %s439 = smul.u32 16, %s19
      %p440 = scmp.lt.s32.totalorder %s18, 1
      %s441 = scalar_select %p440, %s18, 1
      %p442 = scmp.lt.s32.totalorder %s439, 15
      %s443 = scalar_select %p442, %s439, 15
      %s444 = smul.addr %s441, 16
      %s445 = sadd.s32 %s443, %s444
      %s446 = smul.addr %s445, 4
      %s447 = scalar_lea.vmem %s3, %s446
      // Predicated region
      $region33: #{transition_up.2} parent=31 // pred_check
        %p448 = pneg %p116
      $region34: #{transition_up.2} parent=31 // pred_check_branch
        %450 = sbr.rel (%p448) target = $region36
      $region35: #{transition_up.2} parent=31 // pred_region
        %s451 = smul.u32 16, %s19
      $region36: #{transition_up.2} parent=31 // pred_fallthru
        _
    $region32: #{transition_up.2} parent=5 // pred_fallthru
      _
    %p452 = scmp.le.s32.totalorder 2, %s9
    // Predicated region
    $region37: #{transition_up.2} parent=5 // pred_check
      %p453 = pneg %p452
    $region38: #{transition_up.2} parent=5 // pred_check_branch
      %455 = sbr.rel (%p453) target = $region40
    $region39: #{transition_up.2} parent=5 // pred_region
      %s456 = ssub.s32 %s9, 2
      // Predicated region
      $region41: #{transition_up.2} parent=39 // pred_check
        %p457 = pneg %p122
      $region42: #{transition_up.2} parent=39 // pred_check_branch
        %459 = sbr.rel (%p457) target = $region44
      $region43: #{transition_up.2} parent=39 // pred_region
        %s460 = smul.u32 16, %s21
        %p461 = scmp.lt.s32.totalorder %s20, 1
        %s462 = scalar_select %p461, %s20, 1
        %p463 = scmp.lt.s32.totalorder %s460, 15
        %s464 = scalar_select %p463, %s460, 15
        %s465 = smul.addr %s462, 16
        %s466 = sadd.s32 %s464, %s465
        %s467 = smul.addr %s466, 4
        %s468 = scalar_lea.vmem %s3, %s467
      $region44: #{transition_up.2} parent=39 // pred_fallthru
        _
    $region40: #{transition_up.2} parent=5 // pred_fallthru
      _
  $region6: #{transition_up.2} parent=0 // loop_footer
    %s13 = sadd.s32 1, %s9
  $region7: #{transition_up.2} parent=0 // loop_footer_branch
    %8 = sbr.rel target = $region3
  $region8: #{transition_up.2} parent=0 // loop_exit
    _

// kernel: transition_up.3
$region0: #{transition_up.3}
  #allocation0 [shape = 'u32[]', space=smem, size = 0x4, offset = 0x4, fixed_abs, tag = 'smem constant byte address 0x4 - core index']
  #allocation1 [shape = 'u32[72,128]{1,0:T(1,128)}', space=vmem, size = 0x9000, scoped, tag = 'internal scratch']
  %s0 = inlined_call_operand.vmem [shape: bf16[2,128,128], index: 0, kind: input, shape index: {}]
  %s1 = inlined_call_operand.vmem [shape: f32[2,3,128], index: 1, kind: input, shape index: {}]
  %s2 = inlined_call_operand.vmem [shape: bf16[2,16,128], index: 2, kind: input, shape index: {}]
  %s3 = inlined_call_operand.vmem [shape: f32[2,16,3], index: 3, kind: input, shape index: {}]
  %s4 = inlined_call_operand.vmem [shape: bf16[128,128], index: 4, kind: input, shape index: {}]
  %s5 = inlined_call_operand.vmem [shape: f32[1,128], index: 5, kind: input, shape index: {}]
  %s6 = inlined_call_operand.vmem [shape: bf16[2,16,128], index: 6, kind: output, shape index: {}]
  %s7 = sld [smem:[#allocation0]]
  $region57: #{transition_up.3} parent=0
    _
  %s9 = ssub.s32 1, %s7
  %s10 = scalar_select 0, %s9, %s7
  loop: start=0, step=1, limit=4
  $region2: #{transition_up.3} parent=0 // loop_pre_header
    _
  $region3: #{transition_up.3} parent=0 // loop_header
    %s12 = sphi 0, %s16
    %p13 = scmp.ge.s32.totalorder %s12, 4
    %s19 = sphi 0, %s31
    %s20 = sphi 0, %s27
    %s21 = sphi 0, %s19
    %s22 = sphi 0, %s20
    %s23 = sphi 0, %s21
    %s24 = sphi 0, %s22
    %s34 = sphi 0, %s36
    %s37 = sphi 0, %s34
    %s38 = sphi 0, %s37
    %s54 = sphi 0, %s38
    %s60 = sphi 0, %s62
    %s63 = sphi 0, %s60
    %s64 = sphi 0, %s63
    %s80 = sphi 0, %s64
    %s88 = sphi 0, %s90
    %s91 = sphi 0, %s88
    %s92 = sphi 0, %s91
    %s108 = sphi 0, %s92
    %s116 = sphi 0, %s118
    %s119 = sphi 0, %s116
    %s120 = sphi 0, %s119
    %s136 = sphi 0, %s120
    %s140 = sphi 0, %s140
    %s142 = sphi 0, %s140
    %s143 = sphi 0, %s142
    %s157 = sphi 0, %s143
    %s161 = sphi 0, %s161
    %s163 = sphi 0, %s161
    %s164 = sphi 0, %s163
    %s178 = sphi 0, %s164
    %s186 = sphi 0, %s188
    %s189 = sphi 0, %s186
    %s190 = sphi 0, %s189
    %s206 = sphi 0, %s190
  $region4: #{transition_up.3} parent=0 // loop_header_branch
    %15 = sbr.rel (%p13) target = $region8
  $region5: #{transition_up.3} parent=0 // loop_body
    %s17 = ssub.s32 %s12, 1
    %s18 = ssub.s32 %s12, 2
    %s25 = sadd.s32 1, %s20
    %p26 = scmp.ge.s32.totalorder %s25, 1
    %s27 = scalar_select %p26, 0, %s25
    %s28 = sadd.s32 1, %s19
    %s29 = scalar_select %p26, %s28, %s19
    %p30 = scmp.ge.s32.totalorder %s29, 2
    %s31 = scalar_select %p30, 0, %s29
    %s32 = ssub.s32 %s19, %s31
    %p33 = scmp.eq.s32.totalorder %s32, 0
    %s35 = sadd.s32 %s34, 1
    %s36 = scalar_select %p33, %s34, %s35
    %p39 = pneg %p33
    %p40 = scmp.eq.s32.totalorder %s12, 1
    %p41 = por %p39, %p40
    %p42 = scmp.ne.s32.totalorder %s34, %s37
    %p43 = scmp.eq.s32.totalorder %s12, 0
    %p44 = por %p42, %p43
    %p45 = scmp.ne.s32.totalorder %s34, %s37
    %p46 = scmp.eq.s32.totalorder %s17, 1
    %p47 = por %p45, %p46
    %p48 = scmp.ne.s32.totalorder %s37, %s38
    %p49 = scmp.eq.s32.totalorder %s17, 0
    %p50 = por %p48, %p49
    %p51 = scmp.ne.s32.totalorder %s37, %s38
    %p52 = scmp.eq.s32.totalorder %s18, 1
    %p53 = por %p51, %p52
    %p55 = scmp.ne.s32.totalorder %s38, %s54
    %p56 = scmp.eq.s32.totalorder %s18, 0
    %p57 = por %p55, %p56
    %s58 = ssub.s32 %s19, %s31
    %p59 = scmp.eq.s32.totalorder %s58, 0
    %s61 = sadd.s32 %s60, 1
    %s62 = scalar_select %p59, %s60, %s61
    %p65 = pneg %p59
    %p66 = scmp.eq.s32.totalorder %s12, 1
    %p67 = por %p65, %p66
    %p68 = scmp.ne.s32.totalorder %s60, %s63
    %p69 = scmp.eq.s32.totalorder %s12, 0
    %p70 = por %p68, %p69
    %p71 = scmp.ne.s32.totalorder %s60, %s63
    %p72 = scmp.eq.s32.totalorder %s17, 1
    %p73 = por %p71, %p72
    %p74 = scmp.ne.s32.totalorder %s63, %s64
    %p75 = scmp.eq.s32.totalorder %s17, 0
    %p76 = por %p74, %p75
    %p77 = scmp.ne.s32.totalorder %s63, %s64
    %p78 = scmp.eq.s32.totalorder %s18, 1
    %p79 = por %p77, %p78
    %p81 = scmp.ne.s32.totalorder %s64, %s80
    %p82 = scmp.eq.s32.totalorder %s18, 0
    %p83 = por %p81, %p82
    %s84 = ssub.s32 %s19, %s31
    %s85 = ssub.s32 %s20, %s27
    %s86 = sor.u32 %s84, %s85
    %p87 = scmp.eq.s32.totalorder %s86, 0
    %s89 = sadd.s32 %s88, 1
    %s90 = scalar_select %p87, %s88, %s89
    %p93 = pneg %p87
    %p94 = scmp.eq.s32.totalorder %s12, 1
    %p95 = por %p93, %p94
    %p96 = scmp.ne.s32.totalorder %s88, %s91
    %p97 = scmp.eq.s32.totalorder %s12, 0
    %p98 = por %p96, %p97
    %p99 = scmp.ne.s32.totalorder %s88, %s91
    %p100 = scmp.eq.s32.totalorder %s17, 1
    %p101 = por %p99, %p100
    %p102 = scmp.ne.s32.totalorder %s91, %s92
    %p103 = scmp.eq.s32.totalorder %s17, 0
    %p104 = por %p102, %p103
    %p105 = scmp.ne.s32.totalorder %s91, %s92
    %p106 = scmp.eq.s32.totalorder %s18, 1
    %p107 = por %p105, %p106
    %p109 = scmp.ne.s32.totalorder %s92, %s108
    %p110 = scmp.eq.s32.totalorder %s18, 0
    %p111 = por %p109, %p110
    %s112 = ssub.s32 %s19, %s31
    %s113 = ssub.s32 %s20, %s27
    %s114 = sor.u32 %s112, %s113
    %p115 = scmp.eq.s32.totalorder %s114, 0
    %s117 = sadd.s32 %s116, 1
    %s118 = scalar_select %p115, %s116, %s117
    %p121 = pneg %p115
    %p122 = scmp.eq.s32.totalorder %s12, 1
    %p123 = por %p121, %p122
    %p124 = scmp.ne.s32.totalorder %s116, %s119
    %p125 = scmp.eq.s32.totalorder %s12, 0
    %p126 = por %p124, %p125
    %p127 = scmp.ne.s32.totalorder %s116, %s119
    %p128 = scmp.eq.s32.totalorder %s17, 1
    %p129 = por %p127, %p128
    %p130 = scmp.ne.s32.totalorder %s119, %s120
    %p131 = scmp.eq.s32.totalorder %s17, 0
    %p132 = por %p130, %p131
    %p133 = scmp.ne.s32.totalorder %s119, %s120
    %p134 = scmp.eq.s32.totalorder %s18, 1
    %p135 = por %p133, %p134
    %p137 = scmp.ne.s32.totalorder %s120, %s136
    %p138 = scmp.eq.s32.totalorder %s18, 0
    %p139 = por %p137, %p138
    %s141 = sadd.s32 %s140, 1
    %p144 = scmp.eq.s32.totalorder %s12, 1
    %p145 = scmp.ne.s32.totalorder %s140, %s142
    %p146 = scmp.eq.s32.totalorder %s12, 0
    %p147 = por %p145, %p146
    %p148 = scmp.ne.s32.totalorder %s140, %s142
    %p149 = scmp.eq.s32.totalorder %s17, 1
    %p150 = por %p148, %p149
    %p151 = scmp.ne.s32.totalorder %s142, %s143
    %p152 = scmp.eq.s32.totalorder %s17, 0
    %p153 = por %p151, %p152
    %p154 = scmp.ne.s32.totalorder %s142, %s143
    %p155 = scmp.eq.s32.totalorder %s18, 1
    %p156 = por %p154, %p155
    %p158 = scmp.ne.s32.totalorder %s143, %s157
    %p159 = scmp.eq.s32.totalorder %s18, 0
    %p160 = por %p158, %p159
    %s162 = sadd.s32 %s161, 1
    %p165 = scmp.eq.s32.totalorder %s12, 1
    %p166 = scmp.ne.s32.totalorder %s161, %s163
    %p167 = scmp.eq.s32.totalorder %s12, 0
    %p168 = por %p166, %p167
    %p169 = scmp.ne.s32.totalorder %s161, %s163
    %p170 = scmp.eq.s32.totalorder %s17, 1
    %p171 = por %p169, %p170
    %p172 = scmp.ne.s32.totalorder %s163, %s164
    %p173 = scmp.eq.s32.totalorder %s17, 0
    %p174 = por %p172, %p173
    %p175 = scmp.ne.s32.totalorder %s163, %s164
    %p176 = scmp.eq.s32.totalorder %s18, 1
    %p177 = por %p175, %p176
    %p179 = scmp.ne.s32.totalorder %s164, %s178
    %p180 = scmp.eq.s32.totalorder %s18, 0
    %p181 = por %p179, %p180
    %s182 = ssub.s32 %s19, %s31
    %s183 = ssub.s32 %s20, %s27
    %s184 = sor.u32 %s182, %s183
    %p185 = scmp.eq.s32.totalorder %s184, 0
    %s187 = sadd.s32 %s186, 1
    %s188 = scalar_select %p185, %s186, %s187
    %p191 = pneg %p185
    %p192 = scmp.eq.s32.totalorder %s12, 1
    %p193 = por %p191, %p192
    %p194 = scmp.ne.s32.totalorder %s186, %s189
    %p195 = scmp.eq.s32.totalorder %s12, 0
    %p196 = por %p194, %p195
    %p197 = scmp.ne.s32.totalorder %s186, %s189
    %p198 = scmp.eq.s32.totalorder %s17, 1
    %p199 = por %p197, %p198
    %p200 = scmp.ne.s32.totalorder %s189, %s190
    %p201 = scmp.eq.s32.totalorder %s17, 0
    %p202 = por %p200, %p201
    %p203 = scmp.ne.s32.totalorder %s189, %s190
    %p204 = scmp.eq.s32.totalorder %s18, 1
    %p205 = por %p203, %p204
    %p207 = scmp.ne.s32.totalorder %s190, %s206
    %p208 = scmp.eq.s32.totalorder %s18, 0
    %p209 = por %p207, %p208
    %p210 = scmp.le.s32.totalorder 1, %s12
    %p211 = scmp.lt.s32.totalorder %s12, 3
    %p212 = pnand %p210, %p211
    %p213 = pneg %p212
    // Predicated region
    $region9: #{transition_up.3} parent=5 // pred_check
      _
    $region10: #{transition_up.3} parent=5 // pred_check_branch
      %215 = sbr.rel (%p212) target = $region12
    $region11: #{transition_up.3} parent=5 // pred_region
      %s216 = ssub.s32 %s12, 1
      // Predicated region
      $region13: #{transition_up.3} parent=11 // pred_check
        %p217 = pneg %p153
      $region14: #{transition_up.3} parent=11 // pred_check_branch
        %219 = sbr.rel (%p217) target = $region16
      $region15: #{transition_up.3} parent=11 // pred_region
        _
      $region16: #{transition_up.3} parent=11 // pred_fallthru
        _
      // Predicated region
      $region17: #{transition_up.3} parent=11 // pred_check
        %p220 = pneg %p174
      $region18: #{transition_up.3} parent=11 // pred_check_branch
        %222 = sbr.rel (%p220) target = $region20
      $region19: #{transition_up.3} parent=11 // pred_region
        _
      $region20: #{transition_up.3} parent=11 // pred_fallthru
        _
    $region12: #{transition_up.3} parent=5 // pred_fallthru
      _
    %p223 = scmp.lt.s32.totalorder %s12, 2
    // Predicated region
    $region21: #{transition_up.3} parent=5 // pred_check
      %p224 = pneg %p223
    $region22: #{transition_up.3} parent=5 // pred_check_branch
      %226 = sbr.rel (%p224) target = $region24
    $region23: #{transition_up.3} parent=5 // pred_region
      // Predicated region
      $region25: #{transition_up.3} parent=23 // pred_check
        %p227 = pneg %p44
      $region26: #{transition_up.3} parent=23 // pred_check_branch
        %229 = sbr.rel (%p227) target = $region28
      $region27: #{transition_up.3} parent=23 // pred_region
        %p230 = scmp.lt.s32.totalorder %s19, 1
        %s231 = scalar_select %p230, %s19, 1
        %s232 = smul.addr %s231, 16
        %s233 = smul.addr %s232, 4
        %s234 = scalar_lea.vmem %s0, %s233
      $region28: #{transition_up.3} parent=23 // pred_fallthru
        _
      // Predicated region
      $region29: #{transition_up.3} parent=23 // pred_check
        %p235 = pneg %p70
      $region30: #{transition_up.3} parent=23 // pred_check_branch
        %237 = sbr.rel (%p235) target = $region32
      $region31: #{transition_up.3} parent=23 // pred_region
        %p238 = scmp.lt.s32.totalorder %s19, 1
        %s239 = scalar_select %p238, %s19, 1
        %s240 = smul.addr %s239, 4
        %s241 = scalar_lea.vmem %s1, %s240
      $region32: #{transition_up.3} parent=23 // pred_fallthru
        _
      // Predicated region
      $region33: #{transition_up.3} parent=23 // pred_check
        %p242 = pneg %p98
      $region34: #{transition_up.3} parent=23 // pred_check_branch
        %244 = sbr.rel (%p242) target = $region36
      $region35: #{transition_up.3} parent=23 // pred_region
        %s245 = smul.u32 2, %s20
        %p246 = scmp.lt.s32.totalorder %s19, 1
        %s247 = scalar_select %p246, %s19, 1
        %p248 = scmp.lt.s32.totalorder %s245, 1
        %s249 = scalar_select %p248, %s245, 1
        %s250 = smul.addr %s247, 2
        %s251 = sadd.s32 %s249, %s250
        %s252 = smul.addr %s251, 4
        %s253 = scalar_lea.vmem %s2, %s252
        %s254 = smul.u32 2, %s20
      $region36: #{transition_up.3} parent=23 // pred_fallthru
        _
      // Predicated region
      $region37: #{transition_up.3} parent=23 // pred_check
        %p255 = pneg %p126
      $region38: #{transition_up.3} parent=23 // pred_check_branch
        %257 = sbr.rel (%p255) target = $region40
      $region39: #{transition_up.3} parent=23 // pred_region
        %s258 = smul.u32 2, %s20
        %p259 = scmp.lt.s32.totalorder %s19, 1
        %s260 = scalar_select %p259, %s19, 1
        %p261 = scmp.lt.s32.totalorder %s258, 1
        %s262 = scalar_select %p261, %s258, 1
        %s263 = smul.addr %s260, 2
        %s264 = sadd.s32 %s262, %s263
        %s265 = smul.addr %s264, 8
        %s266 = scalar_lea.vmem %s3, %s265
        %s267 = smul.u32 2, %s20
      $region40: #{transition_up.3} parent=23 // pred_fallthru
        _
    $region24: #{transition_up.3} parent=5 // pred_fallthru
      _
    %p268 = scmp.le.s32.totalorder 1, %s12
    %p269 = scmp.lt.s32.totalorder %s12, 3
    %p270 = pnand %p268, %p269
    %p271 = pneg %p270
    // Predicated region
    $region41: #{transition_up.3} parent=5 // pred_check
      _
    $region42: #{transition_up.3} parent=5 // pred_check_branch
      %273 = sbr.rel (%p270) target = $region44
    $region43: #{transition_up.3} parent=5 // pred_region
      %s274 = ssub.s32 %s12, 1
      %p275 = scmp.lt.s32.totalorder %s21, 1
      %s276 = scalar_select %p275, %s21, 1
      %s277 = smul.addr %s276, 16
      %s278 = smul.addr %s277, 4
      %s279 = scalar_lea.vmem %s0, %s278
      %p280 = pneg %p50
      %p281 = pneg %p47
      %p282 = scmp.lt.s32.totalorder %s21, 1
      %s283 = scalar_select %p282, %s21, 1
      %s284 = smul.addr %s283, 4
      %s285 = scalar_lea.vmem %s1, %s284
      %p286 = pneg %p76
      %p287 = pneg %p73
      %s288 = smul.u32 2, %s22
      %p289 = scmp.lt.s32.totalorder %s21, 1
      %s290 = scalar_select %p289, %s21, 1
      %p291 = scmp.lt.s32.totalorder %s288, 1
      %s292 = scalar_select %p291, %s288, 1
      %s293 = smul.addr %s290, 2
      %s294 = sadd.s32 %s292, %s293
      %s295 = smul.addr %s294, 4
      %s296 = scalar_lea.vmem %s2, %s295
      %p297 = pneg %p104
      %p298 = pneg %p101
      %s299 = smul.u32 2, %s22
      %p300 = scmp.lt.s32.totalorder %s21, 1
      %s301 = scalar_select %p300, %s21, 1
      %p302 = scmp.lt.s32.totalorder %s299, 1
      %s303 = scalar_select %p302, %s299, 1
      %s304 = smul.addr %s301, 2
      %s305 = sadd.s32 %s303, %s304
      %s306 = smul.addr %s305, 8
      %s307 = scalar_lea.vmem %s3, %s306
      %p308 = pneg %p132
      %p309 = pneg %p129
      %p310 = pneg %p153
      %p311 = pneg %p150
      %p312 = pneg %p174
      %p313 = pneg %p171
      %p314 = pneg %p202
      %p315 = pneg %p199
      %s316 = smul.u32 2, %s22
      %p317 = scmp.lt.s32.totalorder %s21, 1
      %s318 = scalar_select %p317, %s21, 1
      %p319 = scmp.lt.s32.totalorder %s316, 1
      %s320 = scalar_select %p319, %s316, 1
      %s321 = smul.addr %s318, 2
      %s322 = sadd.s32 %s320, %s321
      %s323 = smul.addr %s322, 4
      %s324 = scalar_lea.vmem %s6, %s323
      %p325 = scmp.lt.s32.totalorder %s21, 1
      %s326 = scalar_select %p325, %s21, 1
      %s327 = smul.addr %s326, 16
      %s328 = smul.addr %s327, 4
      %s329 = scalar_lea.vmem %s0, %s328
      %p330 = scmp.lt.s32.totalorder %s21, 1
      %s331 = scalar_select %p330, %s21, 1
      %s332 = smul.addr %s331, 4
      %s333 = scalar_lea.vmem %s1, %s332
      %s334 = smul.u32 2, %s22
      %p335 = scmp.lt.s32.totalorder %s21, 1
      %s336 = scalar_select %p335, %s21, 1
      %p337 = scmp.lt.s32.totalorder %s334, 1
      %s338 = scalar_select %p337, %s334, 1
      %s339 = smul.addr %s336, 2
      %s340 = sadd.s32 %s338, %s339
      %s341 = smul.addr %s340, 4
      %s342 = scalar_lea.vmem %s2, %s341
      %s343 = smul.u32 2, %s22
      %s344 = smul.u32 2, %s22
      %p345 = scmp.lt.s32.totalorder %s21, 1
      %s346 = scalar_select %p345, %s21, 1
      %p347 = scmp.lt.s32.totalorder %s344, 1
      %s348 = scalar_select %p347, %s344, 1
      %s349 = smul.addr %s346, 2
      %s350 = sadd.s32 %s348, %s349
      %s351 = smul.addr %s350, 8
      %s352 = scalar_lea.vmem %s3, %s351
      %s353 = smul.u32 2, %s22
      %s354 = smul.u32 2, %s22
      %p355 = scmp.lt.s32.totalorder %s21, 1
      %s356 = scalar_select %p355, %s21, 1
      %p357 = scmp.lt.s32.totalorder %s354, 1
      %s358 = scalar_select %p357, %s354, 1
      %s359 = smul.addr %s356, 2
      %s360 = sadd.s32 %s358, %s359
      %s361 = smul.addr %s360, 4
      %s362 = scalar_lea.vmem %s6, %s361
      %s363 = smul.u32 2, %s22
      %v364 = vld [vmem:[%s352] sm:$0xff]
      %v365 = vld [vmem:[%s352 + $0x8] sm:$0xff]
      %v366 = vld [vmem:[%s333] sm:$0x7]
      %368 = vset.pattern.permute.xlu0 0
      %369 = vperm.xlu0 %368, %v364
      %v370 = vpop.permute.xlu0 %369
      %373 = vset.pattern.permute.xlu0 0
      %374 = vperm.xlu0 %373, %v365
      %v375 = vpop.permute.xlu0 %374
      %v377 = vperm.slane %v366, 0
      %v378 = vsub.f32 %v370, %v377
      %v379 = vsub.f32 %v375, %v377
      %v380 = vmul.f32 %v378, %v378
      %v381 = vmul.f32 %v379, %v379
      %382 = vset.pattern.permute.xlu0 1
      %383 = vperm.xlu0 %382, %v364
      %v384 = vpop.permute.xlu0 %383
      %386 = vset.pattern.permute.xlu0 1
      %387 = vperm.xlu0 %386, %v365
      %v388 = vpop.permute.xlu0 %387
      %v390 = vperm.slane %v366, 1
      %v391 = vsub.f32 %v384, %v390
      %v392 = vsub.f32 %v388, %v390
      %v393 = vmul.f32 %v391, %v391
      %v394 = vmul.f32 %v392, %v392
      %v395 = vadd.f32 %v380, %v393
      %v396 = vadd.f32 %v381, %v394
      %397 = vset.pattern.permute.xlu0 2
      %398 = vperm.xlu0 %397, %v364
      %v399 = vpop.permute.xlu0 %398
      %401 = vset.pattern.permute.xlu0 2
      %402 = vperm.xlu0 %401, %v365
      %v403 = vpop.permute.xlu0 %402
      %v405 = vperm.slane %v366, 2
      %v406 = vsub.f32 %v399, %v405
      %v407 = vsub.f32 %v403, %v405
      %v408 = vmul.f32 %v406, %v406
      %v409 = vmul.f32 %v407, %v407
      %v410 = vadd.f32 %v395, %v408
      %v411 = vadd.f32 %v396, %v409
      %v412 = vlaneseq
      %v413 = vand.u32 %v412, 127
      %v414 = vstv 0
      %v415 = vadd.s32 %v414, %v413
      %vm416 = vcmp.lt.s32.totalorder %v415, 8
      %v417 = vsel %vm416, %v410, 1e+30
      %v418 = vsel %vm416, %v411, 1e+30
      %419 = vmin.xlane.f32.xlu0 %v417
      %v420 = vpop.xlane.xlu0 %419
      %421 = vmin.xlane.f32.xlu0 %v418
      %v422 = vpop.xlane.xlu0 %421
      %vm423 = vcmp.le.f32.partialorder %v417, %v420
      %vm424 = vcmp.le.f32.partialorder %v418, %v422
      %v425 = vsel %vm423, 1e+30, %v417
      %v426 = vsel %vm424, 1e+30, %v418
      %427 = vmin.xlane.f32.xlu0 %v425
      %v428 = vpop.xlane.xlu0 %427
      %429 = vmin.xlane.f32.xlu0 %v426
      %v430 = vpop.xlane.xlu0 %429
      %vm431 = vcmp.le.f32.partialorder %v425, %v428
      %vm432 = vcmp.le.f32.partialorder %v426, %v430
      %v433 = vsel %vm431, 1e+30, %v425
      %v434 = vsel %vm432, 1e+30, %v426
      %435 = vmin.xlane.f32.xlu0 %v433
      %v436 = vpop.xlane.xlu0 %435
      %437 = vmin.xlane.f32.xlu0 %v434
      %v438 = vpop.xlane.xlu0 %437
      %v439 = vmin.f32 %v436, 1e+30
      %v440 = vmin.f32 %v438, 1e+30
      %v441 = vmax.f32 %v428, 1e+30
      %v442 = vmax.f32 %v430, 1e+30
      %v443 = vmax.f32 %v420, 1e+30
      %v444 = vmax.f32 %v422, 1e+30
      %v445 = vmin.f32 %v441, %v443
      %v446 = vmin.f32 %v442, %v444
      %v447 = vmin.f32 %v439, %v445
      %v448 = vmin.f32 %v440, %v446
      %v449 = vmax.f32 %v417, 1e-16
      %v450 = vmax.f32 %v418, 1e-16
      %v451 = vrcp.pop %v449
      %v452 = vrcp.pop %v450
      %vm453 = vcmp.le.f32.partialorder %v417, %v447
      %vm454 = vcmp.le.f32.partialorder %v418, %v448
      %v455 = vsel %vm453, %v451, 0.0
      %v456 = vsel %vm454, %v452, 0.0
      %v457 = vpack.c.bf16 %v456, %v455
      %v458 = vld [vmem:[%s329] sm:$0xf]
      %v459 = vld [vmem:[%s329 + $0x4] sm:$0xf]
      %v460 = vld [vmem:[%s329 + $0x8] sm:$0xf]
      %v461 = vld [vmem:[%s329 + $0xc] sm:$0xf]
      %v462 = vld [vmem:[%s329 + $0x10] sm:$0xf]
      %v463 = vld [vmem:[%s329 + $0x14] sm:$0xf]
      %v464 = vld [vmem:[%s329 + $0x18] sm:$0xf]
      %v465 = vld [vmem:[%s329 + $0x1c] sm:$0xf]
      %v466 = vld [vmem:[%s329 + $0x20] sm:$0xf]
      %v467 = vld [vmem:[%s329 + $0x24] sm:$0xf]
      %v468 = vld [vmem:[%s329 + $0x28] sm:$0xf]
      %v469 = vld [vmem:[%s329 + $0x2c] sm:$0xf]
      %v470 = vld [vmem:[%s329 + $0x30] sm:$0xf]
      %v471 = vld [vmem:[%s329 + $0x34] sm:$0xf]
      %v472 = vld [vmem:[%s329 + $0x38] sm:$0xf]
      %v473 = vld [vmem:[%s329 + $0x3c] sm:$0xf]
      %v490 = vunpack.c.l.b16 %v458
      %v491 = vunpack.c.l.b16 %v459
      %v492 = vunpack.c.l.b16 %v460
      %v493 = vunpack.c.l.b16 %v461
      %v494 = vunpack.c.l.b16 %v462
      %v495 = vunpack.c.l.b16 %v463
      %v496 = vunpack.c.l.b16 %v464
      %v497 = vunpack.c.l.b16 %v465
      %v498 = vunpack.c.l.b16 %v466
      %v499 = vunpack.c.l.b16 %v467
      %v500 = vunpack.c.l.b16 %v468
      %v501 = vunpack.c.l.b16 %v469
      %v502 = vunpack.c.l.b16 %v470
      %v503 = vunpack.c.l.b16 %v471
      %v504 = vunpack.c.l.b16 %v472
      %v505 = vunpack.c.l.b16 %v473
      %v506 = vpack.c.b16 %v491, %v490
      %v507 = vpack.c.b16 %v493, %v492
      %v508 = vpack.c.b16 %v495, %v494
      %v509 = vpack.c.b16 %v497, %v496
      %v510 = vpack.c.b16 %v499, %v498
      %v511 = vpack.c.b16 %v501, %v500
      %v512 = vpack.c.b16 %v503, %v502
      %v513 = vpack.c.b16 %v505, %v504
      %522 = vmatpush.bf16.msra.mxu0 %v513
      %523 = vmatpush.bf16.msra.mxu0 %v512
      %524 = vmatpush.bf16.msra.mxu0 %v511
      %525 = vmatpush.bf16.msra.mxu0 %v510
      %526 = vmatpush.bf16.msra.mxu0 %v509
      %527 = vmatpush.bf16.msra.mxu0 %v508
      %528 = vmatpush.bf16.msra.mxu0 %v507
      %529 = vmatpush.bf16.msra.mxu0 %v506
      %530 = vmatmul.bf16.gmra.mxu0 %v457
      %v531 = vpop.f32.mrf.mxu0
      %v532 = vadd.f32 0.0, %v531
      %v533 = vpop.f32.mrf.mxu0
      %v534 = vadd.f32 0.0, %v533
      %535 = vdwg.mxu0
      %v536 = vmax.f32 %v532, 1e-30
      %v537 = vmax.f32 %v534, 1e-30
      %v538 = vrcp.pop %v536
      %v539 = vrcp.pop %v537
      %541 = vset.pattern.permute.xlu0 16
      %542 = vperm.xlu0 %541, %v538
      %v543 = vpop.permute.xlu0 %542
      %546 = vset.pattern.permute.xlu0 16
      %547 = vperm.xlu0 %546, %v539
      %v548 = vpop.permute.xlu0 %547
      %v550 = vmul.f32 %v532, %v543
      %v551 = vmul.f32 %v534, %v548
      %v552 = vld [vmem:[%s342] sm:$0xf]
      %v553 = vld [vmem:[%s342 + $0x4] sm:$0xf]
      %v554 = vld [vmem:[%s4] sm:$0xf]
      %v555 = vld [vmem:[%s4 + $0x4] sm:$0xf]
      %v556 = vld [vmem:[%s4 + $0x8] sm:$0xf]
      %v557 = vld [vmem:[%s4 + $0xc] sm:$0xf]
      %v558 = vld [vmem:[%s4 + $0x10] sm:$0xf]
      %v559 = vld [vmem:[%s4 + $0x14] sm:$0xf]
      %v560 = vld [vmem:[%s4 + $0x18] sm:$0xf]
      %v561 = vld [vmem:[%s4 + $0x1c] sm:$0xf]
      %v562 = vld [vmem:[%s4 + $0x20] sm:$0xf]
      %v563 = vld [vmem:[%s4 + $0x24] sm:$0xf]
      %v564 = vld [vmem:[%s4 + $0x28] sm:$0xf]
      %v565 = vld [vmem:[%s4 + $0x2c] sm:$0xf]
      %v566 = vld [vmem:[%s4 + $0x30] sm:$0xf]
      %v567 = vld [vmem:[%s4 + $0x34] sm:$0xf]
      %v568 = vld [vmem:[%s4 + $0x38] sm:$0xf]
      %v569 = vld [vmem:[%s4 + $0x3c] sm:$0xf]
      %v570 = vld [vmem:[%s5] sm:$0x1]
      %v572 = vperm.slane %v570, 0
      %v576 = vunpack.c.l.b16 %v552
      %v577 = vunpack.c.l.b16 %v553
      %v578 = vpack.c.b16 %v577, %v576
      %v596 = vunpack.c.l.b16 %v554
      %v597 = vunpack.c.l.b16 %v555
      %v598 = vunpack.c.l.b16 %v556
      %v599 = vunpack.c.l.b16 %v557
      %v600 = vunpack.c.l.b16 %v558
      %v601 = vunpack.c.l.b16 %v559
      %v602 = vunpack.c.l.b16 %v560
      %v603 = vunpack.c.l.b16 %v561
      %v604 = vunpack.c.l.b16 %v562
      %v605 = vunpack.c.l.b16 %v563
      %v606 = vunpack.c.l.b16 %v564
      %v607 = vunpack.c.l.b16 %v565
      %v608 = vunpack.c.l.b16 %v566
      %v609 = vunpack.c.l.b16 %v567
      %v610 = vunpack.c.l.b16 %v568
      %v611 = vunpack.c.l.b16 %v569
      %v612 = vpack.c.b16 %v597, %v596
      %v613 = vpack.c.b16 %v599, %v598
      %v614 = vpack.c.b16 %v601, %v600
      %v615 = vpack.c.b16 %v603, %v602
      %v616 = vpack.c.b16 %v605, %v604
      %v617 = vpack.c.b16 %v607, %v606
      %v618 = vpack.c.b16 %v609, %v608
      %v619 = vpack.c.b16 %v611, %v610
      %628 = vmatpush.bf16.msra.mxu0 %v619
      %629 = vmatpush.bf16.msra.mxu0 %v618
      %630 = vmatpush.bf16.msra.mxu0 %v617
      %631 = vmatpush.bf16.msra.mxu0 %v616
      %632 = vmatpush.bf16.msra.mxu0 %v615
      %633 = vmatpush.bf16.msra.mxu0 %v614
      %634 = vmatpush.bf16.msra.mxu0 %v613
      %635 = vmatpush.bf16.msra.mxu0 %v612
      %636 = vmatmul.bf16.gmra.mxu0 %v578
      %v637 = vpop.f32.mrf.mxu0
      %v638 = vadd.f32 %v572, %v637
      %v639 = vpop.f32.mrf.mxu0
      %v640 = vadd.f32 %v572, %v639
      %641 = vdwg.mxu0
      %v642 = vmax.f32 %v638, 0.0
      %v643 = vmax.f32 %v640, 0.0
      %v644 = vadd.f32 %v550, %v642
      %v645 = vadd.f32 %v551, %v643
      %v646 = vpack.c.bf16 %v644, %v644
      %v647 = vpack.c.bf16 %v645, %v645
      %648 = vst [vmem:[%s362] sm:$0xf] %v646
      %649 = vst [vmem:[%s362 + $0x4] sm:$0xf] %v647
      %s650 = smul.u32 2, %s22
      %p651 = scmp.lt.s32.totalorder %s21, 1
      %s652 = scalar_select %p651, %s21, 1
      %p653 = scmp.lt.s32.totalorder %s650, 1
      %s654 = scalar_select %p653, %s650, 1
      %s655 = smul.addr %s652, 2
      %s656 = sadd.s32 %s654, %s655
      %s657 = smul.addr %s656, 4
      %s658 = scalar_lea.vmem %s6, %s657
      // Predicated region
      $region45: #{transition_up.3} parent=43 // pred_check
        %p659 = pneg %p199
      $region46: #{transition_up.3} parent=43 // pred_check_branch
        %661 = sbr.rel (%p659) target = $region48
      $region47: #{transition_up.3} parent=43 // pred_region
        %s662 = smul.u32 2, %s22
      $region48: #{transition_up.3} parent=43 // pred_fallthru
        _
    $region44: #{transition_up.3} parent=5 // pred_fallthru
      _
    %p663 = scmp.le.s32.totalorder 2, %s12
    // Predicated region
    $region49: #{transition_up.3} parent=5 // pred_check
      %p664 = pneg %p663
    $region50: #{transition_up.3} parent=5 // pred_check_branch
      %666 = sbr.rel (%p664) target = $region52
    $region51: #{transition_up.3} parent=5 // pred_region
      %s667 = ssub.s32 %s12, 2
      // Predicated region
      $region53: #{transition_up.3} parent=51 // pred_check
        %p668 = pneg %p205
      $region54: #{transition_up.3} parent=51 // pred_check_branch
        %670 = sbr.rel (%p668) target = $region56
      $region55: #{transition_up.3} parent=51 // pred_region
        %s671 = smul.u32 2, %s24
        %p672 = scmp.lt.s32.totalorder %s23, 1
        %s673 = scalar_select %p672, %s23, 1
        %p674 = scmp.lt.s32.totalorder %s671, 1
        %s675 = scalar_select %p674, %s671, 1
        %s676 = smul.addr %s673, 2
        %s677 = sadd.s32 %s675, %s676
        %s678 = smul.addr %s677, 4
        %s679 = scalar_lea.vmem %s6, %s678
      $region56: #{transition_up.3} parent=51 // pred_fallthru
        _
    $region52: #{transition_up.3} parent=5 // pred_fallthru
      _
  $region6: #{transition_up.3} parent=0 // loop_footer
    %s16 = sadd.s32 1, %s12
  $region7: #{transition_up.3} parent=0 // loop_footer_branch
    %11 = sbr.rel target = $region3
  $region8: #{transition_up.3} parent=0 // loop_exit
    _

</llo_original>
